<compile_context>
chip_gen: v5e
topology: v5e:2x2
jax: 0.10.0
libtpu: 0.0.40
codegen_flags: <defaults>
</compile_context>

<pallas_src>
import math
import functools

import jax
import jax.numpy as jnp
from jax.experimental import pallas as pl
from jax.experimental.pallas import tpu as pltpu


# ----------------------------------------------------------------------------
# Kernel A: GroupNorm + per-head QKV projection (one batch element per step).
# ----------------------------------------------------------------------------
def _groupnorm_qkv_kernel(x_ref, gmat_ref, gamma_ref, beta_ref,
                          wq_ref, wk_ref, wv_ref,
                          q_ref, k_ref, v_ref, *, eps):
    x = x_ref[0].astype(jnp.float32)            # (S, C)
    S, C = x.shape
    gmat = gmat_ref[...]                        # (C, G) one-hot, f32 (host-built)
    G = gmat.shape[1]
    n_per_group = float(S * (C // G))

    # ---- GroupNorm, two-pass variance (mean removed before squaring). ----
    col_sum = jnp.sum(x, axis=0, keepdims=True)                               # (1, C)
    g_mean = jnp.dot(col_sum, gmat, preferred_element_type=jnp.float32) / n_per_group
    mean_c = jax.lax.dot_general(g_mean, gmat, (((1,), (1,)), ((), ())),
                                 preferred_element_type=jnp.float32)          # (1, C)
    xc = x - mean_c
    col_sq = jnp.sum(xc * xc, axis=0, keepdims=True)                          # (1, C)
    g_var = jnp.dot(col_sq, gmat, preferred_element_type=jnp.float32) / n_per_group
    inv_c = jax.lax.dot_general(jax.lax.rsqrt(g_var + eps), gmat,
                                (((1,), (1,)), ((), ())),
                                preferred_element_type=jnp.float32)           # (1, C)
    xn = (xc * inv_c * gamma_ref[...] + beta_ref[...]).astype(jnp.bfloat16)   # (S, C)

    # ---- Per-head QKV projections: bf16 operands, f32 MXU accumulation. ----
    n_head = wq_ref.shape[0]
    for h in range(n_head):                     # static unroll (n_head is small)
        q_ref[0, h] = jnp.dot(xn, wq_ref[h],
                              preferred_element_type=jnp.float32).astype(jnp.bfloat16)
        k_ref[0, h] = jnp.dot(xn, wk_ref[h],
                              preferred_element_type=jnp.float32).astype(jnp.bfloat16)
        v_ref[0, h] = jnp.dot(xn, wv_ref[h],
                              preferred_element_type=jnp.float32).astype(jnp.bfloat16)


# ----------------------------------------------------------------------------
# Kernel B: flash attention (online softmax) + output projection + residual.
# Grid = (B, n_q_tiles, n_head, n_k_tiles); last two axes are reductions.
# ----------------------------------------------------------------------------
def _flash_attn_out_kernel(x_ref, bout_ref, wout_ref, q_ref, k_ref, v_ref,
                           o_ref, m_sc, l_sc, acc_sc, out_sc):
    h = pl.program_id(2)
    kt = pl.program_id(3)
    last_h = pl.num_programs(2) - 1
    last_kt = pl.num_programs(3) - 1

    @pl.when(jnp.logical_and(h == 0, kt == 0))
    def _():
        # Initialize the (TQ, C) output accumulator with residual + conv bias.
        out_sc[...] = x_ref[0].astype(jnp.float32) + bout_ref[...].astype(jnp.float32)

    @pl.when(kt == 0)
    def _():
        m_sc[...] = jnp.full(m_sc.shape, -jnp.inf, dtype=jnp.float32)
        l_sc[...] = jnp.zeros(l_sc.shape, dtype=jnp.float32)
        acc_sc[...] = jnp.zeros(acc_sc.shape, dtype=jnp.float32)

    q = q_ref[0, 0]                             # (TQ, hd) bf16, pre-scaled by 1/sqrt(C)
    k = k_ref[0, 0]                             # (TK, hd) bf16
    v = v_ref[0, 0]                             # (TK, hd) bf16

    # Scores: contract the last dims directly (no k.T / XLU transpose).
    s = jax.lax.dot_general(q, k, (((1,), (1,)), ((), ())),
                            preferred_element_type=jnp.float32)               # (TQ, TK)

    # Online softmax update (f32 math).
    m_prev = m_sc[...]
    m_new = jnp.maximum(m_prev, jnp.max(s, axis=-1, keepdims=True))
    alpha = jnp.exp(m_prev - m_new)
    p = jnp.exp(s - m_new)
    l_sc[...] = alpha * l_sc[...] + jnp.sum(p, axis=-1, keepdims=True)
    acc_sc[...] = alpha * acc_sc[...] + jnp.dot(p.astype(jnp.bfloat16), v,
                                                preferred_element_type=jnp.float32)
    m_sc[...] = m_new

    @pl.when(kt == last_kt)
    def _():
        # Finish this head: normalize (EUP approx reciprocal) and fold the
        # per-head slice of the output projection into the accumulator.
        att = acc_sc[...] * pl.reciprocal(l_sc[...], approx=True)             # (TQ, hd)
        out_sc[...] += jnp.dot(att.astype(jnp.bfloat16), wout_ref[0],
                               preferred_element_type=jnp.float32)            # (TQ, C)

    @pl.when(jnp.logical_and(h == last_h, kt == last_kt))
    def _():
        o_ref[0] = out_sc[...].astype(o_ref.dtype)


def _pick_tile(s, cap):
    """Largest legal tile (<= cap, multiple of 8, divides s); full axis if s <= cap."""
    if s <= cap:
        return s
    for t in range(cap, 7, -1):
        if s % t == 0 and t % 8 == 0:
            return t
    return s


# ----------------------------------------------------------------------------
# Wrapper
# ----------------------------------------------------------------------------
@functools.partial(jax.jit, static_argnames=("n_head", "norm_groups", "eps"))
def self_attention(x, gamma, beta, w_qkv, w_out, b_out, *,
                   n_head=1, norm_groups=16, eps=1e-5):
    """x: (B, C, H, W, D) float32, PyTorch layout. Weights in PyTorch conv shapes."""
    B, C, H, W, D = x.shape
    S = H * W * D
    G = norm_groups
    hd = C // n_head
    x_sc = jnp.transpose(x, (0, 2, 3, 4, 1)).reshape(B, S, C)                 # (B, S, C)

    # --- host-side weight prep (free; removes in-kernel shuffles) ----------
    # qkv conv weight (3C, C): output channels are ordered per-head [q_h|k_h|v_h]
    # (matches the reference's .view(...).chunk(3, dim=2)).
    w = w_qkv.reshape(n_head, 3, hd, C)
    scale = 1.0 / math.sqrt(C)                  # module uses 1/sqrt(channel)
    wq = (jnp.transpose(w[:, 0], (0, 2, 1)) * scale).astype(jnp.bfloat16)     # (nh, C, hd)
    wk = jnp.transpose(w[:, 1], (0, 2, 1)).astype(jnp.bfloat16)
    wv = jnp.transpose(w[:, 2], (0, 2, 1)).astype(jnp.bfloat16)
    # out conv: y = att @ W_out^T + b; split W_out^T rows per head so the
    # projection is accumulated head-by-head (no concat of head outputs).
    wout_heads = jnp.transpose(w_out.reshape(C, C), (1, 0)) \
                    .reshape(n_head, hd, C).astype(jnp.bfloat16)
    # channel -> group one-hot (hoisted out of the kernel).
    gmat = (jax.lax.broadcasted_iota(jnp.int32, (C, G), 0) // (C // G) ==
            jax.lax.broadcasted_iota(jnp.int32, (C, G), 1)).astype(jnp.float32)
    gamma2 = gamma.reshape(1, C).astype(jnp.float32)
    beta2 = beta.reshape(1, C).astype(jnp.float32)
    bout2 = b_out.reshape(1, C).astype(jnp.float32)

    vmem_limit = 48 * 1024 * 1024               # under the 64 MiB physical VMEM of v7x

    # --- Kernel A: GroupNorm + QKV ------------------------------------------
    # TODO(synk): for very large S*C the per-batch (S, C) block should itself be
    # tiled with a separate stats pass; acceptable here since GroupNorm is O(S*C).
    qkv_shape = jax.ShapeDtypeStruct((B, n_head, S, hd), jnp.bfloat16)
    q, k, v = pl.pallas_call(
        functools.partial(_groupnorm_qkv_kernel, eps=eps),
        out_shape=(qkv_shape, qkv_shape, qkv_shape),
        grid_spec=pltpu.PrefetchScalarGridSpec(
            num_scalar_prefetch=0,
            grid=(B,),
            in_specs=[
                pl.BlockSpec((1, S, C), lambda b: (b, 0, 0)),          # x
                pl.BlockSpec((C, G), lambda b: (0, 0)),                # group one-hot
                pl.BlockSpec((1, C), lambda b: (0, 0)),                # gamma
                pl.BlockSpec((1, C), lambda b: (0, 0)),                # beta
                pl.BlockSpec((n_head, C, hd), lambda b: (0, 0, 0)),    # W_q (scaled)
                pl.BlockSpec((n_head, C, hd), lambda b: (0, 0, 0)),    # W_k
                pl.BlockSpec((n_head, C, hd), lambda b: (0, 0, 0)),    # W_v
            ],
            out_specs=(
                pl.BlockSpec((1, n_head, S, hd), lambda b: (b, 0, 0, 0)),
                pl.BlockSpec((1, n_head, S, hd), lambda b: (b, 0, 0, 0)),
                pl.BlockSpec((1, n_head, S, hd), lambda b: (b, 0, 0, 0)),
            ),
        ),
        compiler_params=pltpu.CompilerParams(
            dimension_semantics=("parallel",),
            vmem_limit_bytes=vmem_limit),
    )(x_sc, gmat, gamma2, beta2, wq, wk, wv)

    # --- Kernel B: flash attention + out-proj + bias + residual -------------
    TQ = _pick_tile(S, 256)
    TK = _pick_tile(S, 512)
    n_qt = S // TQ
    n_kt = S // TK

    out = pl.pallas_call(
        _flash_attn_out_kernel,
        out_shape=jax.ShapeDtypeStruct((B, S, C), x.dtype),
        grid_spec=pltpu.PrefetchScalarGridSpec(
            num_scalar_prefetch=0,
            grid=(B, n_qt, n_head, n_kt),
            in_specs=[
                pl.BlockSpec((1, TQ, C), lambda b, qt, h, kt: (b, qt, 0)),        # x (residual)
                pl.BlockSpec((1, C), lambda b, qt, h, kt: (0, 0)),                # b_out
                pl.BlockSpec((1, hd, C), lambda b, qt, h, kt: (h, 0, 0)),         # W_out^T rows of head h
                pl.BlockSpec((1, 1, TQ, hd), lambda b, qt, h, kt: (b, h, qt, 0)), # q
                pl.BlockSpec((1, 1, TK, hd), lambda b, qt, h, kt: (b, h, kt, 0)), # k
                pl.BlockSpec((1, 1, TK, hd), lambda b, qt, h, kt: (b, h, kt, 0)), # v
            ],
            out_specs=pl.BlockSpec((1, TQ, C), lambda b, qt, h, kt: (b, qt, 0)),
            scratch_shapes=[
                pltpu.VMEM((TQ, 1), jnp.float32),    # running max
                pltpu.VMEM((TQ, 1), jnp.float32),    # running sum
                pltpu.VMEM((TQ, hd), jnp.float32),   # per-head attention accumulator
                pltpu.VMEM((TQ, C), jnp.float32),    # residual + bias + head projections
            ],
        ),
        compiler_params=pltpu.CompilerParams(
            dimension_semantics=("parallel", "parallel", "arbitrary", "arbitrary"),
            vmem_limit_bytes=vmem_limit),
        input_output_aliases={0: 0},   # donate x_sc's HBM buffer to the output
    )(x_sc, bout2, wout_heads, q, k, v)

    return jnp.transpose(out.reshape(B, H, W, D, C), (0, 4, 1, 2, 3))


# ----------------------------------------------------------------------------
# Pure-JAX reference (mirrors the PyTorch forward) for validation.
# ----------------------------------------------------------------------------
def reference(x, gamma, beta, w_qkv, w_out, b_out, *, n_head=1, norm_groups=16, eps=1e-5):
    B, C, H, W, D = x.shape
    G = norm_groups
    xg = x.reshape(B, G, C // G, H, W, D)
    mean = xg.mean(axis=(2, 3, 4, 5), keepdims=True)
    var = ((xg - mean) ** 2).mean(axis=(2, 3, 4, 5), keepdims=True)
    norm = ((xg - mean) / jnp.sqrt(var + eps)).reshape(B, C, H, W, D)
    norm = norm * gamma[None, :, None, None, None] + beta[None, :, None, None, None]

    w = w_qkv.reshape(3 * C, C)
    qkv = jnp.einsum('oc,bchwd->bohwd', w, norm)
    hd = C // n_head
    qkv = qkv.reshape(B, n_head, hd * 3, H, W, D)
    q, k, v = qkv[:, :, :hd], qkv[:, :, hd:2 * hd], qkv[:, :, 2 * hd:]

    attn = jnp.einsum('bnchwd,bncyxz->bnhwdyxz', q, k) / math.sqrt(C)
    attn = attn.reshape(B, n_head, H, W, D, -1)
    attn = jax.nn.softmax(attn, axis=-1)
    attn = attn.reshape(B, n_head, H, W, D, H, W, D)

    out = jnp.einsum('bnhwdyxz,bncyxz->bnchwd', attn, v).reshape(B, C, H, W, D)
    wo = w_out.reshape(C, C)
    out = jnp.einsum('oc,bchwd->bohwd', wo, out) + b_out[None, :, None, None, None]
    return out + x


if __name__ == "__main__":
    B, C, H, W, D = 2, 32, 4, 4, 4
    n_head, norm_groups = 1, 16

    key = jax.random.PRNGKey(0)
    kx, kg, kb, kq, kw, kbo = jax.random.split(key, 6)

    x = jax.random.normal(kx, (B, C, H, W, D), dtype=jnp.float32)
    gamma = 1.0 + 0.1 * jax.random.normal(kg, (C,), dtype=jnp.float32)
    beta = 0.1 * jax.random.normal(kb, (C,), dtype=jnp.float32)
    w_qkv = 0.05 * jax.random.normal(kq, (3 * C, C, 1, 1, 1), dtype=jnp.float32)
    w_out = 0.05 * jax.random.normal(kw, (C, C, 1, 1, 1), dtype=jnp.float32)
    b_out = 0.05 * jax.random.normal(kbo, (C,), dtype=jnp.float32)

    out = self_attention(x, gamma, beta, w_qkv, w_out, b_out,
                         n_head=n_head, norm_groups=norm_groups, eps=1e-5)
    out = jax.block_until_ready(out)

    ref = reference(x, gamma, beta, w_qkv, w_out, b_out,
                    n_head=n_head, norm_groups=norm_groups)
    ref = jax.block_until_ready(ref)

    assert out.shape == (B, C, H, W, D)
    # bf16 MXU operands (f32 accumulate) + approx reciprocal -> relaxed tolerance.
    assert jnp.allclose(out, ref, atol=1e-2, rtol=1e-2), \
        f"max abs err = {jnp.max(jnp.abs(out - ref))}"
    print("KERNEL_OK")
</pallas_src>

<mosaic_0001>
module attributes {stable_mosaic.version = 11 : i64} {
  func.func @_groupnorm_qkv_kernel(%arg0: i32, %arg1: memref<1x64x32xf32, #tpu.memory_space<vmem>>, %arg2: memref<32x16xf32, #tpu.memory_space<vmem>>, %arg3: memref<1x32xf32, #tpu.memory_space<vmem>>, %arg4: memref<1x32xf32, #tpu.memory_space<vmem>>, %arg5: memref<1x32x32xbf16, #tpu.memory_space<vmem>>, %arg6: memref<1x32x32xbf16, #tpu.memory_space<vmem>>, %arg7: memref<1x32x32xbf16, #tpu.memory_space<vmem>>, %arg8: memref<1x1x64x32xbf16, #tpu.memory_space<vmem>>, %arg9: memref<1x1x64x32xbf16, #tpu.memory_space<vmem>>, %arg10: memref<1x1x64x32xbf16, #tpu.memory_space<vmem>>) attributes {dimension_semantics = [#tpu.dimension_semantics<parallel>], iteration_bounds = array<i64: 2>, scalar_prefetch = 0 : i64, scratch_operands = 0 : i64, tpu.core_type = #tpu.core_type<tc>, window_params = [{transform_indices = @transform_0, window_bounds = array<i64: 1, 64, 32>}, {pipeline_mode = #tpu.pipeline_mode<synchronous>, transform_indices = @transform_1, window_bounds = array<i64: 32, 16>}, {pipeline_mode = #tpu.pipeline_mode<synchronous>, transform_indices = @transform_2, window_bounds = array<i64: 1, 32>}, {pipeline_mode = #tpu.pipeline_mode<synchronous>, transform_indices = @transform_3, window_bounds = array<i64: 1, 32>}, {pipeline_mode = #tpu.pipeline_mode<synchronous>, transform_indices = @transform_4, window_bounds = array<i64: 1, 32, 32>}, {pipeline_mode = #tpu.pipeline_mode<synchronous>, transform_indices = @transform_5, window_bounds = array<i64: 1, 32, 32>}, {pipeline_mode = #tpu.pipeline_mode<synchronous>, transform_indices = @transform_6, window_bounds = array<i64: 1, 32, 32>}, {transform_indices = @transform_7, window_bounds = array<i64: 1, 1, 64, 32>}, {transform_indices = @transform_8, window_bounds = array<i64: 1, 1, 64, 32>}, {transform_indices = @transform_9, window_bounds = array<i64: 1, 1, 64, 32>}]} {
    %c0 = arith.constant 0 : index
    %c0_0 = arith.constant 0 : index
    %c0_1 = arith.constant 0 : index
    %0 = vector.load %arg1[%c0, %c0_0, %c0_1] : memref<1x64x32xf32, #tpu.memory_space<vmem>>, vector<1x64x32xf32>
    %1 = vector.shape_cast %0 : vector<1x64x32xf32> to vector<64x32xf32>
    %c0_2 = arith.constant 0 : index
    %c0_3 = arith.constant 0 : index
    %2 = vector.load %arg2[%c0_2, %c0_3] : memref<32x16xf32, #tpu.memory_space<vmem>>, vector<32x16xf32>
    %cst = arith.constant dense<0.000000e+00> : vector<32xf32>
    %3 = vector.multi_reduction <add>, %1, %cst [0] : vector<64x32xf32> to vector<32xf32>
    %4 = vector.shape_cast %3 : vector<32xf32> to vector<1x32xf32>
    %cst_4 = arith.constant dense<0.000000e+00> : vector<1x16xf32>
    %5 = tpu.matmul %4, %2, %cst_4 {dimension_numbers = #tpu.dot_dimension_numbers<[1], [0], [0], [1], [0, 0, 1, 1], [], []>} : vector<1x32xf32>, vector<32x16xf32>, vector<1x16xf32> -> vector<1x16xf32>
    %cst_5 = arith.constant 1.280000e+02 : f32
    %6 = vector.broadcast %cst_5 : f32 to vector<1x16xf32>
    %7 = arith.divf %5, %6 : vector<1x16xf32>
    %cst_6 = arith.constant dense<0.000000e+00> : vector<1x32xf32>
    %8 = tpu.matmul %7, %2, %cst_6 {dimension_numbers = #tpu.dot_dimension_numbers<[1], [1], [0], [0], [0, 0, 1, 0], [], []>} : vector<1x16xf32>, vector<32x16xf32>, vector<1x32xf32> -> vector<1x32xf32>
    %9 = vector.broadcast %8 : vector<1x32xf32> to vector<64x32xf32>
    %10 = arith.subf %1, %9 : vector<64x32xf32>
    %11 = arith.mulf %10, %10 : vector<64x32xf32>
    %cst_7 = arith.constant dense<0.000000e+00> : vector<32xf32>
    %12 = vector.multi_reduction <add>, %11, %cst_7 [0] : vector<64x32xf32> to vector<32xf32>
    %13 = vector.shape_cast %12 : vector<32xf32> to vector<1x32xf32>
    %cst_8 = arith.constant dense<0.000000e+00> : vector<1x16xf32>
    %14 = tpu.matmul %13, %2, %cst_8 {dimension_numbers = #tpu.dot_dimension_numbers<[1], [0], [0], [1], [0, 0, 1, 1], [], []>} : vector<1x32xf32>, vector<32x16xf32>, vector<1x16xf32> -> vector<1x16xf32>
    %cst_9 = arith.constant 1.280000e+02 : f32
    %15 = vector.broadcast %cst_9 : f32 to vector<1x16xf32>
    %16 = arith.divf %14, %15 : vector<1x16xf32>
    %cst_10 = arith.constant 9.99999974E-6 : f32
    %17 = vector.broadcast %cst_10 : f32 to vector<1x16xf32>
    %18 = arith.addf %16, %17 : vector<1x16xf32>
    %19 = math.rsqrt %18 : vector<1x16xf32>
    %cst_11 = arith.constant dense<0.000000e+00> : vector<1x32xf32>
    %20 = tpu.matmul %19, %2, %cst_11 {dimension_numbers = #tpu.dot_dimension_numbers<[1], [1], [0], [0], [0, 0, 1, 0], [], []>} : vector<1x16xf32>, vector<32x16xf32>, vector<1x32xf32> -> vector<1x32xf32>
    %21 = vector.broadcast %20 : vector<1x32xf32> to vector<64x32xf32>
    %22 = arith.mulf %10, %21 : vector<64x32xf32>
    %c0_12 = arith.constant 0 : index
    %c0_13 = arith.constant 0 : index
    %23 = vector.load %arg3[%c0_12, %c0_13] : memref<1x32xf32, #tpu.memory_space<vmem>>, vector<1x32xf32>
    %24 = vector.broadcast %23 : vector<1x32xf32> to vector<64x32xf32>
    %25 = arith.mulf %22, %24 : vector<64x32xf32>
    %c0_14 = arith.constant 0 : index
    %c0_15 = arith.constant 0 : index
    %26 = vector.load %arg4[%c0_14, %c0_15] : memref<1x32xf32, #tpu.memory_space<vmem>>, vector<1x32xf32>
    %27 = vector.broadcast %26 : vector<1x32xf32> to vector<64x32xf32>
    %28 = arith.addf %25, %27 : vector<64x32xf32>
    %29 = arith.truncf %28 : vector<64x32xf32> to vector<64x32xbf16>
    %c0_16 = arith.constant 0 : index
    %c0_17 = arith.constant 0 : index
    %c0_18 = arith.constant 0 : index
    %30 = vector.load %arg5[%c0_16, %c0_17, %c0_18] : memref<1x32x32xbf16, #tpu.memory_space<vmem>>, vector<1x32x32xbf16>
    %31 = vector.shape_cast %30 : vector<1x32x32xbf16> to vector<32x32xbf16>
    %cst_19 = arith.constant dense<0.000000e+00> : vector<64x32xf32>
    %32 = tpu.matmul %29, %31, %cst_19 {dimension_numbers = #tpu.dot_dimension_numbers<[1], [0], [0], [1], [0, 0, 1, 1], [], []>} : vector<64x32xbf16>, vector<32x32xbf16>, vector<64x32xf32> -> vector<64x32xf32>
    %33 = arith.truncf %32 : vector<64x32xf32> to vector<64x32xbf16>
    %c0_20 = arith.constant 0 : index
    %c0_21 = arith.constant 0 : index
    %c0_22 = arith.constant 0 : index
    %c0_23 = arith.constant 0 : index
    %34 = vector.load %arg8[%c0_20, %c0_21, %c0_22, %c0_23] : memref<1x1x64x32xbf16, #tpu.memory_space<vmem>>, vector<1x1x64x32xbf16>
    %35 = vector.shape_cast %34 : vector<1x1x64x32xbf16> to vector<64x32xbf16>
    %36 = vector.shape_cast %33 : vector<64x32xbf16> to vector<1x1x64x32xbf16>
    tpu.vector_store %arg8[%c0_20, %c0_21, %c0_22, %c0_23], %36 {strides = array<i32>} : memref<1x1x64x32xbf16, #tpu.memory_space<vmem>>, vector<1x1x64x32xbf16>,
    %c0_24 = arith.constant 0 : index
    %c0_25 = arith.constant 0 : index
    %c0_26 = arith.constant 0 : index
    %37 = vector.load %arg6[%c0_24, %c0_25, %c0_26] : memref<1x32x32xbf16, #tpu.memory_space<vmem>>, vector<1x32x32xbf16>
    %38 = vector.shape_cast %37 : vector<1x32x32xbf16> to vector<32x32xbf16>
    %cst_27 = arith.constant dense<0.000000e+00> : vector<64x32xf32>
    %39 = tpu.matmul %29, %38, %cst_27 {dimension_numbers = #tpu.dot_dimension_numbers<[1], [0], [0], [1], [0, 0, 1, 1], [], []>} : vector<64x32xbf16>, vector<32x32xbf16>, vector<64x32xf32> -> vector<64x32xf32>
    %40 = arith.truncf %39 : vector<64x32xf32> to vector<64x32xbf16>
    %c0_28 = arith.constant 0 : index
    %c0_29 = arith.constant 0 : index
    %c0_30 = arith.constant 0 : index
    %c0_31 = arith.constant 0 : index
    %41 = vector.load %arg9[%c0_28, %c0_29, %c0_30, %c0_31] : memref<1x1x64x32xbf16, #tpu.memory_space<vmem>>, vector<1x1x64x32xbf16>
    %42 = vector.shape_cast %41 : vector<1x1x64x32xbf16> to vector<64x32xbf16>
    %43 = vector.shape_cast %40 : vector<64x32xbf16> to vector<1x1x64x32xbf16>
    tpu.vector_store %arg9[%c0_28, %c0_29, %c0_30, %c0_31], %43 {strides = array<i32>} : memref<1x1x64x32xbf16, #tpu.memory_space<vmem>>, vector<1x1x64x32xbf16>,
    %c0_32 = arith.constant 0 : index
    %c0_33 = arith.constant 0 : index
    %c0_34 = arith.constant 0 : index
    %44 = vector.load %arg7[%c0_32, %c0_33, %c0_34] : memref<1x32x32xbf16, #tpu.memory_space<vmem>>, vector<1x32x32xbf16>
    %45 = vector.shape_cast %44 : vector<1x32x32xbf16> to vector<32x32xbf16>
    %cst_35 = arith.constant dense<0.000000e+00> : vector<64x32xf32>
    %46 = tpu.matmul %29, %45, %cst_35 {dimension_numbers = #tpu.dot_dimension_numbers<[1], [0], [0], [1], [0, 0, 1, 1], [], []>} : vector<64x32xbf16>, vector<32x32xbf16>, vector<64x32xf32> -> vector<64x32xf32>
    %47 = arith.truncf %46 : vector<64x32xf32> to vector<64x32xbf16>
    %c0_36 = arith.constant 0 : index
    %c0_37 = arith.constant 0 : index
    %c0_38 = arith.constant 0 : index
    %c0_39 = arith.constant 0 : index
    %48 = vector.load %arg10[%c0_36, %c0_37, %c0_38, %c0_39] : memref<1x1x64x32xbf16, #tpu.memory_space<vmem>>, vector<1x1x64x32xbf16>
    %49 = vector.shape_cast %48 : vector<1x1x64x32xbf16> to vector<64x32xbf16>
    %50 = vector.shape_cast %47 : vector<64x32xbf16> to vector<1x1x64x32xbf16>
    tpu.vector_store %arg10[%c0_36, %c0_37, %c0_38, %c0_39], %50 {strides = array<i32>} : memref<1x1x64x32xbf16, #tpu.memory_space<vmem>>, vector<1x1x64x32xbf16>,
    return
  }
  func.func @transform_0(%arg0: i32) -> (i32, i32, i32) {
    %c0_i32 = arith.constant 0 : i32
    %c0_i32_0 = arith.constant 0 : i32
    %c0_i32_1 = arith.constant 0 : i32
    return %arg0, %c0_i32, %c0_i32_0 : i32, i32, i32
  }
  func.func @transform_1(%arg0: i32) -> (i32, i32) {
    %c0_i32 = arith.constant 0 : i32
    %c0_i32_0 = arith.constant 0 : i32
    %c0_i32_1 = arith.constant 0 : i32
    return %c0_i32, %c0_i32_0 : i32, i32
  }
  func.func @transform_2(%arg0: i32) -> (i32, i32) {
    %c0_i32 = arith.constant 0 : i32
    %c0_i32_0 = arith.constant 0 : i32
    %c0_i32_1 = arith.constant 0 : i32
    return %c0_i32, %c0_i32_0 : i32, i32
  }
  func.func @transform_3(%arg0: i32) -> (i32, i32) {
    %c0_i32 = arith.constant 0 : i32
    %c0_i32_0 = arith.constant 0 : i32
    %c0_i32_1 = arith.constant 0 : i32
    return %c0_i32, %c0_i32_0 : i32, i32
  }
  func.func @transform_4(%arg0: i32) -> (i32, i32, i32) {
    %c0_i32 = arith.constant 0 : i32
    %c0_i32_0 = arith.constant 0 : i32
    %c0_i32_1 = arith.constant 0 : i32
    %c0_i32_2 = arith.constant 0 : i32
    return %c0_i32, %c0_i32_0, %c0_i32_1 : i32, i32, i32
  }
  func.func @transform_5(%arg0: i32) -> (i32, i32, i32) {
    %c0_i32 = arith.constant 0 : i32
    %c0_i32_0 = arith.constant 0 : i32
    %c0_i32_1 = arith.constant 0 : i32
    %c0_i32_2 = arith.constant 0 : i32
    return %c0_i32, %c0_i32_0, %c0_i32_1 : i32, i32, i32
  }
  func.func @transform_6(%arg0: i32) -> (i32, i32, i32) {
    %c0_i32 = arith.constant 0 : i32
    %c0_i32_0 = arith.constant 0 : i32
    %c0_i32_1 = arith.constant 0 : i32
    %c0_i32_2 = arith.constant 0 : i32
    return %c0_i32, %c0_i32_0, %c0_i32_1 : i32, i32, i32
  }
  func.func @transform_7(%arg0: i32) -> (i32, i32, i32, i32) {
    %c0_i32 = arith.constant 0 : i32
    %c0_i32_0 = arith.constant 0 : i32
    %c0_i32_1 = arith.constant 0 : i32
    %c0_i32_2 = arith.constant 0 : i32
    return %arg0, %c0_i32, %c0_i32_0, %c0_i32_1 : i32, i32, i32, i32
  }
  func.func @transform_8(%arg0: i32) -> (i32, i32, i32, i32) {
    %c0_i32 = arith.constant 0 : i32
    %c0_i32_0 = arith.constant 0 : i32
    %c0_i32_1 = arith.constant 0 : i32
    %c0_i32_2 = arith.constant 0 : i32
    return %arg0, %c0_i32, %c0_i32_0, %c0_i32_1 : i32, i32, i32, i32
  }
  func.func @transform_9(%arg0: i32) -> (i32, i32, i32, i32) {
    %c0_i32 = arith.constant 0 : i32
    %c0_i32_0 = arith.constant 0 : i32
    %c0_i32_1 = arith.constant 0 : i32
    %c0_i32_2 = arith.constant 0 : i32
    return %arg0, %c0_i32, %c0_i32_0, %c0_i32_1 : i32, i32, i32, i32
  }
}

module attributes {stable_mosaic.version = 11 : i64} {
  func.func @_flash_attn_out_kernel(%arg0: i32, %arg1: i32, %arg2: i32, %arg3: i32, %arg4: memref<1x64x32xf32, #tpu.memory_space<vmem>>, %arg5: memref<1x32xf32, #tpu.memory_space<vmem>>, %arg6: memref<1x32x32xbf16, #tpu.memory_space<vmem>>, %arg7: memref<1x1x64x32xbf16, #tpu.memory_space<vmem>>, %arg8: memref<1x1x64x32xbf16, #tpu.memory_space<vmem>>, %arg9: memref<1x1x64x32xbf16, #tpu.memory_space<vmem>>, %arg10: memref<1x64x32xf32, #tpu.memory_space<vmem>>, %arg11: memref<64x1xf32, #tpu.memory_space<vmem>>, %arg12: memref<64x1xf32, #tpu.memory_space<vmem>>, %arg13: memref<64x32xf32, #tpu.memory_space<vmem>>, %arg14: memref<64x32xf32, #tpu.memory_space<vmem>>) attributes {dimension_semantics = [#tpu.dimension_semantics<parallel>, #tpu.dimension_semantics<parallel>, #tpu.dimension_semantics<arbitrary>, #tpu.dimension_semantics<arbitrary>], iteration_bounds = array<i64: 2, 1, 1, 1>, scalar_prefetch = 0 : i64, scratch_operands = 4 : i64, tpu.core_type = #tpu.core_type<tc>, window_params = [{transform_indices = @transform_0, window_bounds = array<i64: 1, 64, 32>}, {pipeline_mode = #tpu.pipeline_mode<synchronous>, transform_indices = @transform_1, window_bounds = array<i64: 1, 32>}, {transform_indices = @transform_2, window_bounds = array<i64: 1, 32, 32>}, {transform_indices = @transform_3, window_bounds = array<i64: 1, 1, 64, 32>}, {transform_indices = @transform_4, window_bounds = array<i64: 1, 1, 64, 32>}, {transform_indices = @transform_5, window_bounds = array<i64: 1, 1, 64, 32>}, {transform_indices = @transform_6, window_bounds = array<i64: 1, 64, 32>}]} {
    %c0_i32 = arith.constant 0 : i32
    %0 = arith.cmpi eq, %arg2, %c0_i32 : i32
    %c0_i32_0 = arith.constant 0 : i32
    %1 = arith.cmpi eq, %arg3, %c0_i32_0 : i32
    %2 = arith.andi %0, %1 : i1
    %3 = arith.extui %2 : i1 to i32
    %c0_i32_1 = arith.constant 0 : i32
    %4 = arith.cmpi ne, %3, %c0_i32_1 : i32
    scf.if %4 {
      %c0_35 = arith.constant 0 : index
      %c0_36 = arith.constant 0 : index
      %c0_37 = arith.constant 0 : index
      %46 = vector.load %arg4[%c0_35, %c0_36, %c0_37] : memref<1x64x32xf32, #tpu.memory_space<vmem>>, vector<1x64x32xf32>
      %47 = vector.shape_cast %46 : vector<1x64x32xf32> to vector<64x32xf32>
      %c0_38 = arith.constant 0 : index
      %c0_39 = arith.constant 0 : index
      %48 = vector.load %arg5[%c0_38, %c0_39] : memref<1x32xf32, #tpu.memory_space<vmem>>, vector<1x32xf32>
      %49 = vector.broadcast %48 : vector<1x32xf32> to vector<64x32xf32>
      %50 = arith.addf %47, %49 : vector<64x32xf32>
      %c0_40 = arith.constant 0 : index
      %c0_41 = arith.constant 0 : index
      %51 = vector.load %arg14[%c0_40, %c0_41] : memref<64x32xf32, #tpu.memory_space<vmem>>, vector<64x32xf32>
      tpu.vector_store %arg14[%c0_40, %c0_41], %50 {strides = array<i32>} : memref<64x32xf32, #tpu.memory_space<vmem>>, vector<64x32xf32>,
    } else {
    }
    %c0_i32_2 = arith.constant 0 : i32
    %5 = arith.cmpi eq, %arg3, %c0_i32_2 : i32
    %6 = arith.extui %5 : i1 to i32
    %c0_i32_3 = arith.constant 0 : i32
    %7 = arith.cmpi ne, %6, %c0_i32_3 : i32
    scf.if %7 {
      %cst_35 = arith.constant 0xFF800000 : f32
      %46 = vector.broadcast %cst_35 : f32 to vector<64x1xf32>
      %c0_36 = arith.constant 0 : index
      %c0_37 = arith.constant 0 : index
      %47 = vector.load %arg11[%c0_36, %c0_37] : memref<64x1xf32, #tpu.memory_space<vmem>>, vector<64x1xf32>
      tpu.vector_store %arg11[%c0_36, %c0_37], %46 {strides = array<i32>} : memref<64x1xf32, #tpu.memory_space<vmem>>, vector<64x1xf32>,
      %cst_38 = arith.constant 0.000000e+00 : f32
      %48 = vector.broadcast %cst_38 : f32 to vector<64x1xf32>
      %c0_39 = arith.constant 0 : index
      %c0_40 = arith.constant 0 : index
      %49 = vector.load %arg12[%c0_39, %c0_40] : memref<64x1xf32, #tpu.memory_space<vmem>>, vector<64x1xf32>
      tpu.vector_store %arg12[%c0_39, %c0_40], %48 {strides = array<i32>} : memref<64x1xf32, #tpu.memory_space<vmem>>, vector<64x1xf32>,
      %cst_41 = arith.constant 0.000000e+00 : f32
      %50 = vector.broadcast %cst_41 : f32 to vector<64x32xf32>
      %c0_42 = arith.constant 0 : index
      %c0_43 = arith.constant 0 : index
      %51 = vector.load %arg13[%c0_42, %c0_43] : memref<64x32xf32, #tpu.memory_space<vmem>>, vector<64x32xf32>
      tpu.vector_store %arg13[%c0_42, %c0_43], %50 {strides = array<i32>} : memref<64x32xf32, #tpu.memory_space<vmem>>, vector<64x32xf32>,
    } else {
    }
    %c0 = arith.constant 0 : index
    %c0_4 = arith.constant 0 : index
    %c0_5 = arith.constant 0 : index
    %c0_6 = arith.constant 0 : index
    %8 = vector.load %arg7[%c0, %c0_4, %c0_5, %c0_6] : memref<1x1x64x32xbf16, #tpu.memory_space<vmem>>, vector<1x1x64x32xbf16>
    %9 = vector.shape_cast %8 : vector<1x1x64x32xbf16> to vector<64x32xbf16>
    %c0_7 = arith.constant 0 : index
    %c0_8 = arith.constant 0 : index
    %c0_9 = arith.constant 0 : index
    %c0_10 = arith.constant 0 : index
    %10 = vector.load %arg8[%c0_7, %c0_8, %c0_9, %c0_10] : memref<1x1x64x32xbf16, #tpu.memory_space<vmem>>, vector<1x1x64x32xbf16>
    %11 = vector.shape_cast %10 : vector<1x1x64x32xbf16> to vector<64x32xbf16>
    %c0_11 = arith.constant 0 : index
    %c0_12 = arith.constant 0 : index
    %c0_13 = arith.constant 0 : index
    %c0_14 = arith.constant 0 : index
    %12 = vector.load %arg9[%c0_11, %c0_12, %c0_13, %c0_14] : memref<1x1x64x32xbf16, #tpu.memory_space<vmem>>, vector<1x1x64x32xbf16>
    %13 = vector.shape_cast %12 : vector<1x1x64x32xbf16> to vector<64x32xbf16>
    %cst = arith.constant dense<0.000000e+00> : vector<64x64xf32>
    %14 = tpu.matmul %9, %11, %cst {dimension_numbers = #tpu.dot_dimension_numbers<[1], [1], [0], [0], [0, 0, 1, 0], [], []>} : vector<64x32xbf16>, vector<64x32xbf16>, vector<64x64xf32> -> vector<64x64xf32>
    %c0_15 = arith.constant 0 : index
    %c0_16 = arith.constant 0 : index
    %15 = vector.load %arg11[%c0_15, %c0_16] : memref<64x1xf32, #tpu.memory_space<vmem>>, vector<64x1xf32>
    %cst_17 = arith.constant dense<0xFF800000> : vector<64xf32>
    %16 = vector.multi_reduction <maximumf>, %14, %cst_17 [1] : vector<64x64xf32> to vector<64xf32>
    %17 = vector.shape_cast %16 : vector<64xf32> to vector<64x1xf32>
    %18 = arith.maximumf %15, %17 : vector<64x1xf32>
    %19 = arith.subf %15, %18 : vector<64x1xf32>
    %20 = math.exp %19 : vector<64x1xf32>
    %21 = vector.broadcast %18 : vector<64x1xf32> to vector<64x64xf32>
    %22 = arith.subf %14, %21 : vector<64x64xf32>
    %23 = math.exp %22 : vector<64x64xf32>
    %c0_18 = arith.constant 0 : index
    %c0_19 = arith.constant 0 : index
    %24 = vector.load %arg12[%c0_18, %c0_19] : memref<64x1xf32, #tpu.memory_space<vmem>>, vector<64x1xf32>
    %25 = arith.mulf %20, %24 : vector<64x1xf32>
    %cst_20 = arith.constant dense<0.000000e+00> : vector<64xf32>
    %26 = vector.multi_reduction <add>, %23, %cst_20 [1] : vector<64x64xf32> to vector<64xf32>
    %27 = vector.shape_cast %26 : vector<64xf32> to vector<64x1xf32>
    %28 = arith.addf %25, %27 : vector<64x1xf32>
    %c0_21 = arith.constant 0 : index
    %c0_22 = arith.constant 0 : index
    %29 = vector.load %arg12[%c0_21, %c0_22] : memref<64x1xf32, #tpu.memory_space<vmem>>, vector<64x1xf32>
    tpu.vector_store %arg12[%c0_21, %c0_22], %28 {strides = array<i32>} : memref<64x1xf32, #tpu.memory_space<vmem>>, vector<64x1xf32>,
    %c0_23 = arith.constant 0 : index
    %c0_24 = arith.constant 0 : index
    %30 = vector.load %arg13[%c0_23, %c0_24] : memref<64x32xf32, #tpu.memory_space<vmem>>, vector<64x32xf32>
    %31 = vector.broadcast %20 : vector<64x1xf32> to vector<64x32xf32>
    %32 = arith.mulf %31, %30 : vector<64x32xf32>
    %33 = arith.truncf %23 : vector<64x64xf32> to vector<64x64xbf16>
    %cst_25 = arith.constant dense<0.000000e+00> : vector<64x32xf32>
    %34 = tpu.matmul %33, %13, %cst_25 {dimension_numbers = #tpu.dot_dimension_numbers<[1], [0], [0], [1], [0, 0, 1, 1], [], []>} : vector<64x64xbf16>, vector<64x32xbf16>, vector<64x32xf32> -> vector<64x32xf32>
    %35 = arith.addf %32, %34 : vector<64x32xf32>
    %c0_26 = arith.constant 0 : index
    %c0_27 = arith.constant 0 : index
    %36 = vector.load %arg13[%c0_26, %c0_27] : memref<64x32xf32, #tpu.memory_space<vmem>>, vector<64x32xf32>
    tpu.vector_store %arg13[%c0_26, %c0_27], %35 {strides = array<i32>} : memref<64x32xf32, #tpu.memory_space<vmem>>, vector<64x32xf32>,
    %c0_28 = arith.constant 0 : index
    %c0_29 = arith.constant 0 : index
    %37 = vector.load %arg11[%c0_28, %c0_29] : memref<64x1xf32, #tpu.memory_space<vmem>>, vector<64x1xf32>
    tpu.vector_store %arg11[%c0_28, %c0_29], %18 {strides = array<i32>} : memref<64x1xf32, #tpu.memory_space<vmem>>, vector<64x1xf32>,
    %c0_i32_30 = arith.constant 0 : i32
    %38 = arith.cmpi eq, %arg3, %c0_i32_30 : i32
    %39 = arith.extui %38 : i1 to i32
    %c0_i32_31 = arith.constant 0 : i32
    %40 = arith.cmpi ne, %39, %c0_i32_31 : i32
    scf.if %40 {
      %c0_35 = arith.constant 0 : index
      %c0_36 = arith.constant 0 : index
      %46 = vector.load %arg13[%c0_35, %c0_36] : memref<64x32xf32, #tpu.memory_space<vmem>>, vector<64x32xf32>
      %c0_37 = arith.constant 0 : index
      %c0_38 = arith.constant 0 : index
      %47 = vector.load %arg12[%c0_37, %c0_38] : memref<64x1xf32, #tpu.memory_space<vmem>>, vector<64x1xf32>
      %48 = tpu.reciprocal %47 {approx = true} : vector<64x1xf32> -> vector<64x1xf32>
      %49 = vector.broadcast %48 : vector<64x1xf32> to vector<64x32xf32>
      %50 = arith.mulf %46, %49 : vector<64x32xf32>
      %c0_39 = arith.constant 0 : index
      %c0_40 = arith.constant 0 : index
      %51 = vector.load %arg14[%c0_39, %c0_40] : memref<64x32xf32, #tpu.memory_space<vmem>>, vector<64x32xf32>
      %52 = arith.truncf %50 : vector<64x32xf32> to vector<64x32xbf16>
      %c0_41 = arith.constant 0 : index
      %c0_42 = arith.constant 0 : index
      %c0_43 = arith.constant 0 : index
      %53 = vector.load %arg6[%c0_41, %c0_42, %c0_43] : memref<1x32x32xbf16, #tpu.memory_space<vmem>>, vector<1x32x32xbf16>
      %54 = vector.shape_cast %53 : vector<1x32x32xbf16> to vector<32x32xbf16>
      %cst_44 = arith.constant dense<0.000000e+00> : vector<64x32xf32>
      %55 = tpu.matmul %52, %54, %cst_44 {dimension_numbers = #tpu.dot_dimension_numbers<[1], [0], [0], [1], [0, 0, 1, 1], [], []>} : vector<64x32xbf16>, vector<32x32xbf16>, vector<64x32xf32> -> vector<64x32xf32>
      %56 = arith.addf %51, %55 : vector<64x32xf32>
      %c0_45 = arith.constant 0 : index
      %c0_46 = arith.constant 0 : index
      %57 = vector.load %arg14[%c0_45, %c0_46] : memref<64x32xf32, #tpu.memory_space<vmem>>, vector<64x32xf32>
      tpu.vector_store %arg14[%c0_45, %c0_46], %56 {strides = array<i32>} : memref<64x32xf32, #tpu.memory_space<vmem>>, vector<64x32xf32>,
    } else {
    }
    %c0_i32_32 = arith.constant 0 : i32
    %41 = arith.cmpi eq, %arg2, %c0_i32_32 : i32
    %c0_i32_33 = arith.constant 0 : i32
    %42 = arith.cmpi eq, %arg3, %c0_i32_33 : i32
    %43 = arith.andi %41, %42 : i1
    %44 = arith.extui %43 : i1 to i32
    %c0_i32_34 = arith.constant 0 : i32
    %45 = arith.cmpi ne, %44, %c0_i32_34 : i32
    scf.if %45 {
      %c0_35 = arith.constant 0 : index
      %c0_36 = arith.constant 0 : index
      %46 = vector.load %arg14[%c0_35, %c0_36] : memref<64x32xf32, #tpu.memory_space<vmem>>, vector<64x32xf32>
      %c0_37 = arith.constant 0 : index
      %c0_38 = arith.constant 0 : index
      %c0_39 = arith.constant 0 : index
      %47 = vector.load %arg10[%c0_37, %c0_38, %c0_39] : memref<1x64x32xf32, #tpu.memory_space<vmem>>, vector<1x64x32xf32>
      %48 = vector.shape_cast %47 : vector<1x64x32xf32> to vector<64x32xf32>
      %49 = vector.shape_cast %46 : vector<64x32xf32> to vector<1x64x32xf32>
      tpu.vector_store %arg10[%c0_37, %c0_38, %c0_39], %49 {strides = array<i32>} : memref<1x64x32xf32, #tpu.memory_space<vmem>>, vector<1x64x32xf32>,
    } else {
    }
    return
  }
  func.func @transform_0(%arg0: i32, %arg1: i32, %arg2: i32, %arg3: i32) -> (i32, i32, i32) {
    %c0_i32 = arith.constant 0 : i32
    %c0_i32_0 = arith.constant 0 : i32
    return %arg0, %arg1, %c0_i32 : i32, i32, i32
  }
  func.func @transform_1(%arg0: i32, %arg1: i32, %arg2: i32, %arg3: i32) -> (i32, i32) {
    %c0_i32 = arith.constant 0 : i32
    %c0_i32_0 = arith.constant 0 : i32
    %c0_i32_1 = arith.constant 0 : i32
    return %c0_i32, %c0_i32_0 : i32, i32
  }
  func.func @transform_2(%arg0: i32, %arg1: i32, %arg2: i32, %arg3: i32) -> (i32, i32, i32) {
    %c0_i32 = arith.constant 0 : i32
    %c0_i32_0 = arith.constant 0 : i32
    %c0_i32_1 = arith.constant 0 : i32
    return %arg2, %c0_i32, %c0_i32_0 : i32, i32, i32
  }
  func.func @transform_3(%arg0: i32, %arg1: i32, %arg2: i32, %arg3: i32) -> (i32, i32, i32, i32) {
    %c0_i32 = arith.constant 0 : i32
    %c0_i32_0 = arith.constant 0 : i32
    return %arg0, %arg2, %arg1, %c0_i32 : i32, i32, i32, i32
  }
  func.func @transform_4(%arg0: i32, %arg1: i32, %arg2: i32, %arg3: i32) -> (i32, i32, i32, i32) {
    %c0_i32 = arith.constant 0 : i32
    %c0_i32_0 = arith.constant 0 : i32
    return %arg0, %arg2, %arg3, %c0_i32 : i32, i32, i32, i32
  }
  func.func @transform_5(%arg0: i32, %arg1: i32, %arg2: i32, %arg3: i32) -> (i32, i32, i32, i32) {
    %c0_i32 = arith.constant 0 : i32
    %c0_i32_0 = arith.constant 0 : i32
    return %arg0, %arg2, %arg3, %c0_i32 : i32, i32, i32, i32
  }
  func.func @transform_6(%arg0: i32, %arg1: i32, %arg2: i32, %arg3: i32) -> (i32, i32, i32) {
    %c0_i32 = arith.constant 0 : i32
    %c0_i32_0 = arith.constant 0 : i32
    return %arg0, %arg1, %c0_i32 : i32, i32, i32
  }
}

</mosaic_0001>

<llo_original>
// kernel: self_attention.2
$region0: #{self_attention.2}
  #allocation0 [shape = 'u32[]', space=smem, size = 0x4, offset = 0x4, fixed_abs, tag = 'smem constant byte address 0x4 - core index']
  #allocation1 [shape = 'u32[72,128]{1,0:T(1,128)}', space=vmem, size = 0x9000, scoped, tag = 'internal scratch']
  %s0 = inlined_call_operand.vmem [shape: f32[2,64,32], index: 0, kind: input, shape index: {}]
  %s1 = inlined_call_operand.vmem [shape: f32[32,16], index: 1, kind: input, shape index: {}]
  %s2 = inlined_call_operand.vmem [shape: f32[1,32], index: 2, kind: input, shape index: {}]
  %s3 = inlined_call_operand.vmem [shape: f32[1,32], index: 3, kind: input, shape index: {}]
  %s4 = inlined_call_operand.vmem [shape: bf16[1,32,32], index: 4, kind: input, shape index: {}]
  %s5 = inlined_call_operand.vmem [shape: bf16[1,32,32], index: 5, kind: input, shape index: {}]
  %s6 = inlined_call_operand.vmem [shape: bf16[1,32,32], index: 6, kind: input, shape index: {}]
  %s7 = inlined_call_operand.vmem [shape: bf16[2,1,64,32], index: 7, kind: output, shape index: {0}]
  %s8 = inlined_call_operand.vmem [shape: bf16[2,1,64,32], index: 8, kind: output, shape index: {1}]
  %s9 = inlined_call_operand.vmem [shape: bf16[2,1,64,32], index: 9, kind: output, shape index: {2}]
  %10 = xla_tuple %s7, %s8, %s9
  %s11 = sld [smem:[#allocation0]]
  $region77: #{self_attention.2} parent=0
    _
  %s13 = ssub.s32 1, %s11
  %s14 = scalar_select 0, %s13, %s11
  loop: start=0, step=1, limit=4
  $region2: #{self_attention.2} parent=0 // loop_pre_header
    _
  $region3: #{self_attention.2} parent=0 // loop_header
    %s16 = sphi 0, %s20
    %p17 = scmp.ge.s32.totalorder %s16, 4
    %s26 = sphi 0, %s28
    %s29 = sphi 0, %s26
    %s30 = sphi 0, %s29
    %s46 = sphi 0, %s30
    %s50 = sphi 0, %s50
    %s52 = sphi 0, %s50
    %s53 = sphi 0, %s52
    %s67 = sphi 0, %s53
    %s71 = sphi 0, %s71
    %s73 = sphi 0, %s71
    %s74 = sphi 0, %s73
    %s88 = sphi 0, %s74
    %s92 = sphi 0, %s92
    %s94 = sphi 0, %s92
    %s95 = sphi 0, %s94
    %s109 = sphi 0, %s95
    %s113 = sphi 0, %s113
    %s115 = sphi 0, %s113
    %s116 = sphi 0, %s115
    %s130 = sphi 0, %s116
    %s134 = sphi 0, %s134
    %s136 = sphi 0, %s134
    %s137 = sphi 0, %s136
    %s151 = sphi 0, %s137
    %s155 = sphi 0, %s155
    %s157 = sphi 0, %s155
    %s158 = sphi 0, %s157
    %s172 = sphi 0, %s158
    %s178 = sphi 0, %s180
    %s181 = sphi 0, %s178
    %s182 = sphi 0, %s181
    %s198 = sphi 0, %s182
    %s204 = sphi 0, %s206
    %s207 = sphi 0, %s204
    %s208 = sphi 0, %s207
    %s224 = sphi 0, %s208
    %s230 = sphi 0, %s232
    %s233 = sphi 0, %s230
    %s234 = sphi 0, %s233
    %s250 = sphi 0, %s234
  $region4: #{self_attention.2} parent=0 // loop_header_branch
    %19 = sbr.rel (%p17) target = $region8
  $region5: #{self_attention.2} parent=0 // loop_body
    %s21 = ssub.s32 %s16, 1
    %s22 = ssub.s32 %s16, 2
    %s23 = sadd.s32 %s16, 1
    %s24 = ssub.s32 %s16, %s23
    %p25 = scmp.eq.s32.totalorder %s24, 0
    %s27 = sadd.s32 %s26, 1
    %s28 = scalar_select %p25, %s26, %s27
    %p31 = pneg %p25
    %p32 = scmp.eq.s32.totalorder %s16, 1
    %p33 = por %p31, %p32
    %p34 = scmp.ne.s32.totalorder %s26, %s29
    %p35 = scmp.eq.s32.totalorder %s16, 0
    %p36 = por %p34, %p35
    %p37 = scmp.ne.s32.totalorder %s26, %s29
    %p38 = scmp.eq.s32.totalorder %s21, 1
    %p39 = por %p37, %p38
    %p40 = scmp.ne.s32.totalorder %s29, %s30
    %p41 = scmp.eq.s32.totalorder %s21, 0
    %p42 = por %p40, %p41
    %p43 = scmp.ne.s32.totalorder %s29, %s30
    %p44 = scmp.eq.s32.totalorder %s22, 1
    %p45 = por %p43, %p44
    %p47 = scmp.ne.s32.totalorder %s30, %s46
    %p48 = scmp.eq.s32.totalorder %s22, 0
    %p49 = por %p47, %p48
    %s51 = sadd.s32 %s50, 1
    %p54 = scmp.eq.s32.totalorder %s16, 1
    %p55 = scmp.ne.s32.totalorder %s50, %s52
    %p56 = scmp.eq.s32.totalorder %s16, 0
    %p57 = por %p55, %p56
    %p58 = scmp.ne.s32.totalorder %s50, %s52
    %p59 = scmp.eq.s32.totalorder %s21, 1
    %p60 = por %p58, %p59
    %p61 = scmp.ne.s32.totalorder %s52, %s53
    %p62 = scmp.eq.s32.totalorder %s21, 0
    %p63 = por %p61, %p62
    %p64 = scmp.ne.s32.totalorder %s52, %s53
    %p65 = scmp.eq.s32.totalorder %s22, 1
    %p66 = por %p64, %p65
    %p68 = scmp.ne.s32.totalorder %s53, %s67
    %p69 = scmp.eq.s32.totalorder %s22, 0
    %p70 = por %p68, %p69
    %s72 = sadd.s32 %s71, 1
    %p75 = scmp.eq.s32.totalorder %s16, 1
    %p76 = scmp.ne.s32.totalorder %s71, %s73
    %p77 = scmp.eq.s32.totalorder %s16, 0
    %p78 = por %p76, %p77
    %p79 = scmp.ne.s32.totalorder %s71, %s73
    %p80 = scmp.eq.s32.totalorder %s21, 1
    %p81 = por %p79, %p80
    %p82 = scmp.ne.s32.totalorder %s73, %s74
    %p83 = scmp.eq.s32.totalorder %s21, 0
    %p84 = por %p82, %p83
    %p85 = scmp.ne.s32.totalorder %s73, %s74
    %p86 = scmp.eq.s32.totalorder %s22, 1
    %p87 = por %p85, %p86
    %p89 = scmp.ne.s32.totalorder %s74, %s88
    %p90 = scmp.eq.s32.totalorder %s22, 0
    %p91 = por %p89, %p90
    %s93 = sadd.s32 %s92, 1
    %p96 = scmp.eq.s32.totalorder %s16, 1
    %p97 = scmp.ne.s32.totalorder %s92, %s94
    %p98 = scmp.eq.s32.totalorder %s16, 0
    %p99 = por %p97, %p98
    %p100 = scmp.ne.s32.totalorder %s92, %s94
    %p101 = scmp.eq.s32.totalorder %s21, 1
    %p102 = por %p100, %p101
    %p103 = scmp.ne.s32.totalorder %s94, %s95
    %p104 = scmp.eq.s32.totalorder %s21, 0
    %p105 = por %p103, %p104
    %p106 = scmp.ne.s32.totalorder %s94, %s95
    %p107 = scmp.eq.s32.totalorder %s22, 1
    %p108 = por %p106, %p107
    %p110 = scmp.ne.s32.totalorder %s95, %s109
    %p111 = scmp.eq.s32.totalorder %s22, 0
    %p112 = por %p110, %p111
    %s114 = sadd.s32 %s113, 1
    %p117 = scmp.eq.s32.totalorder %s16, 1
    %p118 = scmp.ne.s32.totalorder %s113, %s115
    %p119 = scmp.eq.s32.totalorder %s16, 0
    %p120 = por %p118, %p119
    %p121 = scmp.ne.s32.totalorder %s113, %s115
    %p122 = scmp.eq.s32.totalorder %s21, 1
    %p123 = por %p121, %p122
    %p124 = scmp.ne.s32.totalorder %s115, %s116
    %p125 = scmp.eq.s32.totalorder %s21, 0
    %p126 = por %p124, %p125
    %p127 = scmp.ne.s32.totalorder %s115, %s116
    %p128 = scmp.eq.s32.totalorder %s22, 1
    %p129 = por %p127, %p128
    %p131 = scmp.ne.s32.totalorder %s116, %s130
    %p132 = scmp.eq.s32.totalorder %s22, 0
    %p133 = por %p131, %p132
    %s135 = sadd.s32 %s134, 1
    %p138 = scmp.eq.s32.totalorder %s16, 1
    %p139 = scmp.ne.s32.totalorder %s134, %s136
    %p140 = scmp.eq.s32.totalorder %s16, 0
    %p141 = por %p139, %p140
    %p142 = scmp.ne.s32.totalorder %s134, %s136
    %p143 = scmp.eq.s32.totalorder %s21, 1
    %p144 = por %p142, %p143
    %p145 = scmp.ne.s32.totalorder %s136, %s137
    %p146 = scmp.eq.s32.totalorder %s21, 0
    %p147 = por %p145, %p146
    %p148 = scmp.ne.s32.totalorder %s136, %s137
    %p149 = scmp.eq.s32.totalorder %s22, 1
    %p150 = por %p148, %p149
    %p152 = scmp.ne.s32.totalorder %s137, %s151
    %p153 = scmp.eq.s32.totalorder %s22, 0
    %p154 = por %p152, %p153
    %s156 = sadd.s32 %s155, 1
    %p159 = scmp.eq.s32.totalorder %s16, 1
    %p160 = scmp.ne.s32.totalorder %s155, %s157
    %p161 = scmp.eq.s32.totalorder %s16, 0
    %p162 = por %p160, %p161
    %p163 = scmp.ne.s32.totalorder %s155, %s157
    %p164 = scmp.eq.s32.totalorder %s21, 1
    %p165 = por %p163, %p164
    %p166 = scmp.ne.s32.totalorder %s157, %s158
    %p167 = scmp.eq.s32.totalorder %s21, 0
    %p168 = por %p166, %p167
    %p169 = scmp.ne.s32.totalorder %s157, %s158
    %p170 = scmp.eq.s32.totalorder %s22, 1
    %p171 = por %p169, %p170
    %p173 = scmp.ne.s32.totalorder %s158, %s172
    %p174 = scmp.eq.s32.totalorder %s22, 0
    %p175 = por %p173, %p174
    %s176 = ssub.s32 %s16, %s23
    %p177 = scmp.eq.s32.totalorder %s176, 0
    %s179 = sadd.s32 %s178, 1
    %s180 = scalar_select %p177, %s178, %s179
    %p183 = pneg %p177
    %p184 = scmp.eq.s32.totalorder %s16, 1
    %p185 = por %p183, %p184
    %p186 = scmp.ne.s32.totalorder %s178, %s181
    %p187 = scmp.eq.s32.totalorder %s16, 0
    %p188 = por %p186, %p187
    %p189 = scmp.ne.s32.totalorder %s178, %s181
    %p190 = scmp.eq.s32.totalorder %s21, 1
    %p191 = por %p189, %p190
    %p192 = scmp.ne.s32.totalorder %s181, %s182
    %p193 = scmp.eq.s32.totalorder %s21, 0
    %p194 = por %p192, %p193
    %p195 = scmp.ne.s32.totalorder %s181, %s182
    %p196 = scmp.eq.s32.totalorder %s22, 1
    %p197 = por %p195, %p196
    %p199 = scmp.ne.s32.totalorder %s182, %s198
    %p200 = scmp.eq.s32.totalorder %s22, 0
    %p201 = por %p199, %p200
    %s202 = ssub.s32 %s16, %s23
    %p203 = scmp.eq.s32.totalorder %s202, 0
    %s205 = sadd.s32 %s204, 1
    %s206 = scalar_select %p203, %s204, %s205
    %p209 = pneg %p203
    %p210 = scmp.eq.s32.totalorder %s16, 1
    %p211 = por %p209, %p210
    %p212 = scmp.ne.s32.totalorder %s204, %s207
    %p213 = scmp.eq.s32.totalorder %s16, 0
    %p214 = por %p212, %p213
    %p215 = scmp.ne.s32.totalorder %s204, %s207
    %p216 = scmp.eq.s32.totalorder %s21, 1
    %p217 = por %p215, %p216
    %p218 = scmp.ne.s32.totalorder %s207, %s208
    %p219 = scmp.eq.s32.totalorder %s21, 0
    %p220 = por %p218, %p219
    %p221 = scmp.ne.s32.totalorder %s207, %s208
    %p222 = scmp.eq.s32.totalorder %s22, 1
    %p223 = por %p221, %p222
    %p225 = scmp.ne.s32.totalorder %s208, %s224
    %p226 = scmp.eq.s32.totalorder %s22, 0
    %p227 = por %p225, %p226
    %s228 = ssub.s32 %s16, %s23
    %p229 = scmp.eq.s32.totalorder %s228, 0
    %s231 = sadd.s32 %s230, 1
    %s232 = scalar_select %p229, %s230, %s231
    %p235 = pneg %p229
    %p236 = scmp.eq.s32.totalorder %s16, 1
    %p237 = por %p235, %p236
    %p238 = scmp.ne.s32.totalorder %s230, %s233
    %p239 = scmp.eq.s32.totalorder %s16, 0
    %p240 = por %p238, %p239
    %p241 = scmp.ne.s32.totalorder %s230, %s233
    %p242 = scmp.eq.s32.totalorder %s21, 1
    %p243 = por %p241, %p242
    %p244 = scmp.ne.s32.totalorder %s233, %s234
    %p245 = scmp.eq.s32.totalorder %s21, 0
    %p246 = por %p244, %p245
    %p247 = scmp.ne.s32.totalorder %s233, %s234
    %p248 = scmp.eq.s32.totalorder %s22, 1
    %p249 = por %p247, %p248
    %p251 = scmp.ne.s32.totalorder %s234, %s250
    %p252 = scmp.eq.s32.totalorder %s22, 0
    %p253 = por %p251, %p252
    %p254 = scmp.le.s32.totalorder 1, %s16
    %p255 = scmp.lt.s32.totalorder %s16, 3
    %p256 = pnand %p254, %p255
    %p257 = pneg %p256
    // Predicated region
    $region9: #{self_attention.2} parent=5 // pred_check
      _
    $region10: #{self_attention.2} parent=5 // pred_check_branch
      %259 = sbr.rel (%p256) target = $region12
    $region11: #{self_attention.2} parent=5 // pred_region
      %s260 = ssub.s32 %s16, 1
      // Predicated region
      $region13: #{self_attention.2} parent=11 // pred_check
        %p261 = pneg %p63
      $region14: #{self_attention.2} parent=11 // pred_check_branch
        %263 = sbr.rel (%p261) target = $region16
      $region15: #{self_attention.2} parent=11 // pred_region
        _
      $region16: #{self_attention.2} parent=11 // pred_fallthru
        _
      // Predicated region
      $region17: #{self_attention.2} parent=11 // pred_check
        %p264 = pneg %p84
      $region18: #{self_attention.2} parent=11 // pred_check_branch
        %266 = sbr.rel (%p264) target = $region20
      $region19: #{self_attention.2} parent=11 // pred_region
        _
      $region20: #{self_attention.2} parent=11 // pred_fallthru
        _
      // Predicated region
      $region21: #{self_attention.2} parent=11 // pred_check
        %p267 = pneg %p105
      $region22: #{self_attention.2} parent=11 // pred_check_branch
        %269 = sbr.rel (%p267) target = $region24
      $region23: #{self_attention.2} parent=11 // pred_region
        _
      $region24: #{self_attention.2} parent=11 // pred_fallthru
        _
      // Predicated region
      $region25: #{self_attention.2} parent=11 // pred_check
        %p270 = pneg %p126
      $region26: #{self_attention.2} parent=11 // pred_check_branch
        %272 = sbr.rel (%p270) target = $region28
      $region27: #{self_attention.2} parent=11 // pred_region
        _
      $region28: #{self_attention.2} parent=11 // pred_fallthru
        _
      // Predicated region
      $region29: #{self_attention.2} parent=11 // pred_check
        %p273 = pneg %p147
      $region30: #{self_attention.2} parent=11 // pred_check_branch
        %275 = sbr.rel (%p273) target = $region32
      $region31: #{self_attention.2} parent=11 // pred_region
        _
      $region32: #{self_attention.2} parent=11 // pred_fallthru
        _
      // Predicated region
      $region33: #{self_attention.2} parent=11 // pred_check
        %p276 = pneg %p168
      $region34: #{self_attention.2} parent=11 // pred_check_branch
        %278 = sbr.rel (%p276) target = $region36
      $region35: #{self_attention.2} parent=11 // pred_region
        _
      $region36: #{self_attention.2} parent=11 // pred_fallthru
        _
    $region12: #{self_attention.2} parent=5 // pred_fallthru
      _
    %p279 = scmp.lt.s32.totalorder %s16, 2
    // Predicated region
    $region37: #{self_attention.2} parent=5 // pred_check
      %p280 = pneg %p279
    $region38: #{self_attention.2} parent=5 // pred_check_branch
      %282 = sbr.rel (%p280) target = $region40
    $region39: #{self_attention.2} parent=5 // pred_region
      // Predicated region
      $region41: #{self_attention.2} parent=39 // pred_check
        %p283 = pneg %p36
      $region42: #{self_attention.2} parent=39 // pred_check_branch
        %285 = sbr.rel (%p283) target = $region44
      $region43: #{self_attention.2} parent=39 // pred_region
        %p286 = scmp.lt.s32.totalorder %s16, 1
        %s287 = scalar_select %p286, %s16, 1
        %s288 = smul.addr %s287, 8
        %s289 = smul.addr %s288, 8
        %s290 = scalar_lea.vmem %s0, %s289
      $region44: #{self_attention.2} parent=39 // pred_fallthru
        _
    $region40: #{self_attention.2} parent=5 // pred_fallthru
      _
    %p291 = scmp.le.s32.totalorder 1, %s16
    %p292 = scmp.lt.s32.totalorder %s16, 3
    %p293 = pnand %p291, %p292
    %p294 = pneg %p293
    // Predicated region
    $region45: #{self_attention.2} parent=5 // pred_check
      _
    $region46: #{self_attention.2} parent=5 // pred_check_branch
      %296 = sbr.rel (%p293) target = $region48
    $region47: #{self_attention.2} parent=5 // pred_region
      %s297 = ssub.s32 %s16, 1
      %p298 = scmp.lt.s32.totalorder %s21, 1
      %s299 = scalar_select %p298, %s21, 1
      %s300 = smul.addr %s299, 8
      %s301 = smul.addr %s300, 8
      %s302 = scalar_lea.vmem %s0, %s301
      %p303 = pneg %p42
      %p304 = pneg %p39
      %p305 = pneg %p63
      %p306 = pneg %p60
      %p307 = pneg %p84
      %p308 = pneg %p81
      %p309 = pneg %p105
      %p310 = pneg %p102
      %p311 = pneg %p126
      %p312 = pneg %p123
      %p313 = pneg %p147
      %p314 = pneg %p144
      %p315 = pneg %p168
      %p316 = pneg %p165
      %p317 = pneg %p194
      %p318 = pneg %p191
      %p319 = scmp.lt.s32.totalorder %s21, 1
      %s320 = scalar_select %p319, %s21, 1
      %s321 = smul.addr %s320, 8
      %s322 = smul.addr %s321, 4
      %s323 = scalar_lea.vmem %s7, %s322
      %p324 = pneg %p220
      %p325 = pneg %p217
      %p326 = scmp.lt.s32.totalorder %s21, 1
      %s327 = scalar_select %p326, %s21, 1
      %s328 = smul.addr %s327, 8
      %s329 = smul.addr %s328, 4
      %s330 = scalar_lea.vmem %s8, %s329
      %p331 = pneg %p246
      %p332 = pneg %p243
      %p333 = scmp.lt.s32.totalorder %s21, 1
      %s334 = scalar_select %p333, %s21, 1
      %s335 = smul.addr %s334, 8
      %s336 = smul.addr %s335, 4
      %s337 = scalar_lea.vmem %s9, %s336
      %p338 = scmp.lt.s32.totalorder %s21, 1
      %s339 = scalar_select %p338, %s21, 1
      %s340 = smul.addr %s339, 8
      %s341 = smul.addr %s340, 8
      %s342 = scalar_lea.vmem %s0, %s341
      %p343 = scmp.lt.s32.totalorder %s21, 1
      %s344 = scalar_select %p343, %s21, 1
      %s345 = smul.addr %s344, 8
      %s346 = smul.addr %s345, 4
      %s347 = scalar_lea.vmem %s7, %s346
      %p348 = scmp.lt.s32.totalorder %s21, 1
      %s349 = scalar_select %p348, %s21, 1
      %s350 = smul.addr %s349, 8
      %s351 = smul.addr %s350, 4
      %s352 = scalar_lea.vmem %s8, %s351
      %p353 = scmp.lt.s32.totalorder %s21, 1
      %s354 = scalar_select %p353, %s21, 1
      %s355 = smul.addr %s354, 8
      %s356 = smul.addr %s355, 4
      %s357 = scalar_lea.vmem %s9, %s356
      %v359 = vld [vmem:[%s342] sm:$0xff]
      %v360 = vld [vmem:[%s342 + $0x8] sm:$0xff]
      %v361 = vld [vmem:[%s342 + $0x10] sm:$0xff]
      %v362 = vld [vmem:[%s342 + $0x18] sm:$0xff]
      %v363 = vld [vmem:[%s342 + $0x20] sm:$0xff]
      %v364 = vld [vmem:[%s342 + $0x28] sm:$0xff]
      %v365 = vld [vmem:[%s342 + $0x30] sm:$0xff]
      %v366 = vld [vmem:[%s342 + $0x38] sm:$0xff]
      %v367 = vld [vmem:[%s1] sm:$0xff]
      %v368 = vld [vmem:[%s1 + $0x8] sm:$0xff]
      %v369 = vld [vmem:[%s1 + $0x10] sm:$0xff]
      %v370 = vld [vmem:[%s1 + $0x18] sm:$0xff]
      %vm371 = vcmask 261120
      %v372 = vsel %vm371, %v359, 0.0
      %v373 = vsel %vm371, %v360, 0.0
      %v374 = vadd.f32 %v372, %v373
      %v375 = vsel %vm371, %v361, 0.0
      %v376 = vadd.f32 %v374, %v375
      %v377 = vsel %vm371, %v362, 0.0
      %v378 = vadd.f32 %v376, %v377
      %v379 = vsel %vm371, %v363, 0.0
      %v380 = vadd.f32 %v378, %v379
      %v381 = vsel %vm371, %v364, 0.0
      %v382 = vadd.f32 %v380, %v381
      %v383 = vsel %vm371, %v365, 0.0
      %v384 = vadd.f32 %v382, %v383
      %v385 = vsel %vm371, %v366, 0.0
      %v386 = vadd.f32 %v384, %v385
      %v387 = vrot.slane %v386, 4
      %v388 = vadd.f32 %v386, %v387
      %v389 = vrot.slane %v388, 2
      %v390 = vadd.f32 %v388, %v389
      %v391 = vrot.slane %v390, 1
      %v392 = vadd.f32 %v390, %v391
      %v394 = vsel %vm371, %v392, 0
      %396 = vmatpush.msra.mxu0 0.0
      %397 = vmatpush.msra.mxu0 0.0
      %398 = vmatpush.msra.mxu0 0.0
      %399 = vmatpush.msra.mxu0 0.0
      %400 = vmatpush.msra.mxu0 0.0
      %401 = vmatpush.msra.mxu0 0.0
      %402 = vmatpush.msra.mxu0 0.0
      %403 = vmatpush.msra.mxu0 0.0
      %404 = vmatpush.msra.mxu0 0.0
      %405 = vmatpush.msra.mxu0 0.0
      %406 = vmatpush.msra.mxu0 0.0
      %407 = vmatpush.msra.mxu0 0.0
      %408 = vmatpush.msra.mxu0 %v370
      %409 = vmatpush.msra.mxu0 %v369
      %410 = vmatpush.msra.mxu0 %v368
      %411 = vmatpush.msra.mxu0 %v367
      %412 = vmatmul.f32.gmra.mxu0 %v394
      %v413 = vpop.f32.mrf.mxu0
      %v414 = vadd.f32 0.0, %v413
      %415 = vdwg.mxu0
      %v416 = vrcp.pop 128.0
      %v417 = vmul.f32 128.0, %v416
      %v418 = vsub.f32 1.0, %v417
      %v419 = vmul.f32 %v416, %v418
      %v420 = vadd.f32 %v416, %v419
      %vm421 = vweird.f32 %v416
      %v422 = vsel %vm421, %v416, %v420
      %v423 = vmul.f32 %v414, %v422
      %vm424 = vcmask 130048
      %v426 = vsel %vm424, %v423, 0
      %v429 = vsel %vm424, %v367, 0
      %v432 = vsel %vm424, %v368, 0
      %v435 = vsel %vm424, %v369, 0
      %v438 = vsel %vm424, %v370, 0
      %440 = vmatpush.xpose.msra.mxu0 0.0
      %441 = vmatpush.xpose.msra.mxu0 0.0
      %442 = vmatpush.xpose.msra.mxu0 0.0
      %443 = vmatpush.xpose.msra.mxu0 0.0
      %444 = vmatpush.xpose.msra.mxu0 0.0
      %445 = vmatpush.xpose.msra.mxu0 0.0
      %446 = vmatpush.xpose.msra.mxu0 0.0
      %447 = vmatpush.xpose.msra.mxu0 0.0
      %448 = vmatpush.xpose.msra.mxu0 0.0
      %449 = vmatpush.xpose.msra.mxu0 0.0
      %450 = vmatpush.xpose.msra.mxu0 0.0
      %451 = vmatpush.xpose.msra.mxu0 0.0
      %452 = vmatpush.xpose.msra.mxu0 %v438
      %453 = vmatpush.xpose.msra.mxu0 %v435
      %454 = vmatpush.xpose.msra.mxu0 %v432
      %455 = vmatpush.xpose.msra.mxu0 %v429
      %456 = vmatmul.f32.gmra.mxu0 %v426
      %v457 = vpop.f32.mrf.mxu0
      %v458 = vadd.f32 0.0, %v457
      %459 = vdwg.mxu0
      %v460 = vperm.slane %v458, 0
      %v461 = vsub.f32 %v359, %v460
      %v462 = vsub.f32 %v360, %v460
      %v463 = vsub.f32 %v361, %v460
      %v464 = vsub.f32 %v362, %v460
      %v465 = vsub.f32 %v363, %v460
      %v466 = vsub.f32 %v364, %v460
      %v467 = vsub.f32 %v365, %v460
      %v468 = vsub.f32 %v366, %v460
      %v469 = vmul.f32 %v461, %v461
      %v470 = vmul.f32 %v462, %v462
      %v471 = vmul.f32 %v463, %v463
      %v472 = vmul.f32 %v464, %v464
      %v473 = vmul.f32 %v465, %v465
      %v474 = vmul.f32 %v466, %v466
      %v475 = vmul.f32 %v467, %v467
      %v476 = vmul.f32 %v468, %v468
      %v477 = vsel %vm371, %v469, 0.0
      %v478 = vsel %vm371, %v470, 0.0
      %v479 = vadd.f32 %v477, %v478
      %v480 = vsel %vm371, %v471, 0.0
      %v481 = vadd.f32 %v479, %v480
      %v482 = vsel %vm371, %v472, 0.0
      %v483 = vadd.f32 %v481, %v482
      %v484 = vsel %vm371, %v473, 0.0
      %v485 = vadd.f32 %v483, %v484
      %v486 = vsel %vm371, %v474, 0.0
      %v487 = vadd.f32 %v485, %v486
      %v488 = vsel %vm371, %v475, 0.0
      %v489 = vadd.f32 %v487, %v488
      %v490 = vsel %vm371, %v476, 0.0
      %v491 = vadd.f32 %v489, %v490
      %v492 = vrot.slane %v491, 4
      %v493 = vadd.f32 %v491, %v492
      %v494 = vrot.slane %v493, 2
      %v495 = vadd.f32 %v493, %v494
      %v496 = vrot.slane %v495, 1
      %v497 = vadd.f32 %v495, %v496
      %v499 = vsel %vm371, %v497, 0
      %501 = vmatpush.msra.mxu0 0.0
      %502 = vmatpush.msra.mxu0 0.0
      %503 = vmatpush.msra.mxu0 0.0
      %504 = vmatpush.msra.mxu0 0.0
      %505 = vmatpush.msra.mxu0 0.0
      %506 = vmatpush.msra.mxu0 0.0
      %507 = vmatpush.msra.mxu0 0.0
      %508 = vmatpush.msra.mxu0 0.0
      %509 = vmatpush.msra.mxu0 0.0
      %510 = vmatpush.msra.mxu0 0.0
      %511 = vmatpush.msra.mxu0 0.0
      %512 = vmatpush.msra.mxu0 0.0
      %513 = vmatpush.msra.mxu0 %v370
      %514 = vmatpush.msra.mxu0 %v369
      %515 = vmatpush.msra.mxu0 %v368
      %516 = vmatpush.msra.mxu0 %v367
      %517 = vmatmul.f32.gmra.mxu0 %v499
      %v518 = vpop.f32.mrf.mxu0
      %v519 = vadd.f32 0.0, %v518
      %520 = vdwg.mxu0
      %v521 = vmul.f32 %v519, %v422
      %v522 = vadd.f32 %v521, 1e-05
      %v523 = vrsqrt.pop %v522
      %v524 = vmul.f32 %v523, %v522
      %v525 = vmul.f32 %v524, %v523
      %v526 = vmul.f32 0.5, %v525
      %v527 = vsub.f32 1.5, %v526
      %v528 = vmul.f32 %v523, %v527
      %vm529 = vweird.f32 %v522
      %vm530 = vweird.f32 %v523
      %vm531 = vmor %vm529, %vm530
      %v532 = vsel %vm531, %v523, %v528
      %v534 = vsel %vm424, %v532, 0
      %536 = vmatpush.xpose.msra.mxu0 0.0
      %537 = vmatpush.xpose.msra.mxu0 0.0
      %538 = vmatpush.xpose.msra.mxu0 0.0
      %539 = vmatpush.xpose.msra.mxu0 0.0
      %540 = vmatpush.xpose.msra.mxu0 0.0
      %541 = vmatpush.xpose.msra.mxu0 0.0
      %542 = vmatpush.xpose.msra.mxu0 0.0
      %543 = vmatpush.xpose.msra.mxu0 0.0
      %544 = vmatpush.xpose.msra.mxu0 0.0
      %545 = vmatpush.xpose.msra.mxu0 0.0
      %546 = vmatpush.xpose.msra.mxu0 0.0
      %547 = vmatpush.xpose.msra.mxu0 0.0
      %548 = vmatpush.xpose.msra.mxu0 %v438
      %549 = vmatpush.xpose.msra.mxu0 %v435
      %550 = vmatpush.xpose.msra.mxu0 %v432
      %551 = vmatpush.xpose.msra.mxu0 %v429
      %552 = vmatmul.f32.gmra.mxu0 %v534
      %v553 = vpop.f32.mrf.mxu0
      %v554 = vadd.f32 0.0, %v553
      %555 = vdwg.mxu0
      %v556 = vperm.slane %v554, 0
      %v557 = vmul.f32 %v461, %v556
      %v558 = vmul.f32 %v462, %v556
      %v559 = vmul.f32 %v463, %v556
      %v560 = vmul.f32 %v464, %v556
      %v561 = vmul.f32 %v465, %v556
      %v562 = vmul.f32 %v466, %v556
      %v563 = vmul.f32 %v467, %v556
      %v564 = vmul.f32 %v468, %v556
      %v565 = vld [vmem:[%s2] sm:$0x1]
      %v567 = vperm.slane %v565, 0
      %v569 = vmul.f32 %v557, %v567
      %v570 = vmul.f32 %v558, %v567
      %v571 = vmul.f32 %v559, %v567
      %v572 = vmul.f32 %v560, %v567
      %v573 = vmul.f32 %v561, %v567
      %v574 = vmul.f32 %v562, %v567
      %v575 = vmul.f32 %v563, %v567
      %v576 = vmul.f32 %v564, %v567
      %v577 = vld [vmem:[%s3] sm:$0x1]
      %v579 = vperm.slane %v577, 0
      %v581 = vadd.f32 %v569, %v579
      %v582 = vadd.f32 %v570, %v579
      %v583 = vadd.f32 %v571, %v579
      %v584 = vadd.f32 %v572, %v579
      %v585 = vadd.f32 %v573, %v579
      %v586 = vadd.f32 %v574, %v579
      %v587 = vadd.f32 %v575, %v579
      %v588 = vadd.f32 %v576, %v579
      %v589 = vpack.c.bf16 %v582, %v581
      %v590 = vpack.c.bf16 %v584, %v583
      %v591 = vpack.c.bf16 %v586, %v585
      %v592 = vpack.c.bf16 %v588, %v587
      %v593 = vld [vmem:[%s4] sm:$0xf]
      %v594 = vld [vmem:[%s4 + $0x4] sm:$0xf]
      %v595 = vld [vmem:[%s4 + $0x8] sm:$0xf]
      %v596 = vld [vmem:[%s4 + $0xc] sm:$0xf]
      %v601 = vunpack.c.l.b16 %v593
      %v602 = vunpack.c.l.b16 %v594
      %v603 = vunpack.c.l.b16 %v595
      %v604 = vunpack.c.l.b16 %v596
      %v605 = vpack.c.b16 %v602, %v601
      %v606 = vpack.c.b16 %v604, %v603
      %v610 = vsel %vm371, %v589, 0
      %v613 = vsel %vm371, %v590, 0
      %v616 = vsel %vm371, %v591, 0
      %v619 = vsel %vm371, %v592, 0
      %621 = vmatpush.bf16.msra.mxu0 0
      %622 = vmatpush.bf16.msra.mxu0 0
      %623 = vmatpush.bf16.msra.mxu0 0
      %624 = vmatpush.bf16.msra.mxu0 0
      %625 = vmatpush.bf16.msra.mxu0 0
      %626 = vmatpush.bf16.msra.mxu0 0
      %627 = vmatpush.bf16.msra.mxu0 %v606
      %628 = vmatpush.bf16.msra.mxu0 %v605
      %629 = vmatmul.bf16.gmra.mxu0 %v610
      %v630 = vpop.f32.mrf.mxu0
      %v631 = vadd.f32 0.0, %v630
      %v632 = vpop.f32.mrf.mxu0
      %v633 = vadd.f32 0.0, %v632
      %634 = vmatmul.bf16.gmra.mxu0 %v613
      %v635 = vpop.f32.mrf.mxu0
      %v636 = vadd.f32 0.0, %v635
      %v637 = vpop.f32.mrf.mxu0
      %v638 = vadd.f32 0.0, %v637
      %639 = vmatmul.bf16.gmra.mxu0 %v616
      %v640 = vpop.f32.mrf.mxu0
      %v641 = vadd.f32 0.0, %v640
      %v642 = vpop.f32.mrf.mxu0
      %v643 = vadd.f32 0.0, %v642
      %644 = vmatmul.bf16.gmra.mxu0 %v619
      %v645 = vpop.f32.mrf.mxu0
      %v646 = vadd.f32 0.0, %v645
      %v647 = vpop.f32.mrf.mxu0
      %v648 = vadd.f32 0.0, %v647
      %649 = vdwg.mxu0
      %v650 = vpack.c.bf16 %v631, %v631
      %v651 = vpack.c.bf16 %v633, %v633
      %v652 = vpack.c.bf16 %v636, %v636
      %v653 = vpack.c.bf16 %v638, %v638
      %v654 = vpack.c.bf16 %v641, %v641
      %v655 = vpack.c.bf16 %v643, %v643
      %v656 = vpack.c.bf16 %v646, %v646
      %v657 = vpack.c.bf16 %v648, %v648
      %vm658 = vcmask 257024
      %659 = vst.msk [vmem:[%s347] sm:$0xf] %vm658, %v650
      %660 = vst.msk [vmem:[%s347 + $0x4] sm:$0xf] %vm658, %v651
      %661 = vst.msk [vmem:[%s347 + $0x8] sm:$0xf] %vm658, %v652
      %662 = vst.msk [vmem:[%s347 + $0xc] sm:$0xf] %vm658, %v653
      %663 = vst.msk [vmem:[%s347 + $0x10] sm:$0xf] %vm658, %v654
      %664 = vst.msk [vmem:[%s347 + $0x14] sm:$0xf] %vm658, %v655
      %665 = vst.msk [vmem:[%s347 + $0x18] sm:$0xf] %vm658, %v656
      %666 = vst.msk [vmem:[%s347 + $0x1c] sm:$0xf] %vm658, %v657
      %v667 = vld [vmem:[%s5] sm:$0xf]
      %v668 = vld [vmem:[%s5 + $0x4] sm:$0xf]
      %v669 = vld [vmem:[%s5 + $0x8] sm:$0xf]
      %v670 = vld [vmem:[%s5 + $0xc] sm:$0xf]
      %v675 = vunpack.c.l.b16 %v667
      %v676 = vunpack.c.l.b16 %v668
      %v677 = vunpack.c.l.b16 %v669
      %v678 = vunpack.c.l.b16 %v670
      %v679 = vpack.c.b16 %v676, %v675
      %v680 = vpack.c.b16 %v678, %v677
      %683 = vmatpush.bf16.msra.mxu0 0
      %684 = vmatpush.bf16.msra.mxu0 0
      %685 = vmatpush.bf16.msra.mxu0 0
      %686 = vmatpush.bf16.msra.mxu0 0
      %687 = vmatpush.bf16.msra.mxu0 0
      %688 = vmatpush.bf16.msra.mxu0 0
      %689 = vmatpush.bf16.msra.mxu0 %v680
      %690 = vmatpush.bf16.msra.mxu0 %v679
      %691 = vmatmul.bf16.gmra.mxu0 %v610
      %v692 = vpop.f32.mrf.mxu0
      %v693 = vadd.f32 0.0, %v692
      %v694 = vpop.f32.mrf.mxu0
      %v695 = vadd.f32 0.0, %v694
      %696 = vmatmul.bf16.gmra.mxu0 %v613
      %v697 = vpop.f32.mrf.mxu0
      %v698 = vadd.f32 0.0, %v697
      %v699 = vpop.f32.mrf.mxu0
      %v700 = vadd.f32 0.0, %v699
      %701 = vmatmul.bf16.gmra.mxu0 %v616
      %v702 = vpop.f32.mrf.mxu0
      %v703 = vadd.f32 0.0, %v702
      %v704 = vpop.f32.mrf.mxu0
      %v705 = vadd.f32 0.0, %v704
      %706 = vmatmul.bf16.gmra.mxu0 %v619
      %v707 = vpop.f32.mrf.mxu0
      %v708 = vadd.f32 0.0, %v707
      %v709 = vpop.f32.mrf.mxu0
      %v710 = vadd.f32 0.0, %v709
      %711 = vdwg.mxu0
      %v712 = vpack.c.bf16 %v693, %v693
      %v713 = vpack.c.bf16 %v695, %v695
      %v714 = vpack.c.bf16 %v698, %v698
      %v715 = vpack.c.bf16 %v700, %v700
      %v716 = vpack.c.bf16 %v703, %v703
      %v717 = vpack.c.bf16 %v705, %v705
      %v718 = vpack.c.bf16 %v708, %v708
      %v719 = vpack.c.bf16 %v710, %v710
      %720 = vst.msk [vmem:[%s352] sm:$0xf] %vm658, %v712
      %721 = vst.msk [vmem:[%s352 + $0x4] sm:$0xf] %vm658, %v713
      %722 = vst.msk [vmem:[%s352 + $0x8] sm:$0xf] %vm658, %v714
      %723 = vst.msk [vmem:[%s352 + $0xc] sm:$0xf] %vm658, %v715
      %724 = vst.msk [vmem:[%s352 + $0x10] sm:$0xf] %vm658, %v716
      %725 = vst.msk [vmem:[%s352 + $0x14] sm:$0xf] %vm658, %v717
      %726 = vst.msk [vmem:[%s352 + $0x18] sm:$0xf] %vm658, %v718
      %727 = vst.msk [vmem:[%s352 + $0x1c] sm:$0xf] %vm658, %v719
      %v728 = vld [vmem:[%s6] sm:$0xf]
      %v729 = vld [vmem:[%s6 + $0x4] sm:$0xf]
      %v730 = vld [vmem:[%s6 + $0x8] sm:$0xf]
      %v731 = vld [vmem:[%s6 + $0xc] sm:$0xf]
      %v736 = vunpack.c.l.b16 %v728
      %v737 = vunpack.c.l.b16 %v729
      %v738 = vunpack.c.l.b16 %v730
      %v739 = vunpack.c.l.b16 %v731
      %v740 = vpack.c.b16 %v737, %v736
      %v741 = vpack.c.b16 %v739, %v738
      %744 = vmatpush.bf16.msra.mxu0 0
      %745 = vmatpush.bf16.msra.mxu0 0
      %746 = vmatpush.bf16.msra.mxu0 0
      %747 = vmatpush.bf16.msra.mxu0 0
      %748 = vmatpush.bf16.msra.mxu0 0
      %749 = vmatpush.bf16.msra.mxu0 0
      %750 = vmatpush.bf16.msra.mxu0 %v741
      %751 = vmatpush.bf16.msra.mxu0 %v740
      %752 = vmatmul.bf16.gmra.mxu0 %v610
      %v753 = vpop.f32.mrf.mxu0
      %v754 = vadd.f32 0.0, %v753
      %v755 = vpop.f32.mrf.mxu0
      %v756 = vadd.f32 0.0, %v755
      %757 = vmatmul.bf16.gmra.mxu0 %v613
      %v758 = vpop.f32.mrf.mxu0
      %v759 = vadd.f32 0.0, %v758
      %v760 = vpop.f32.mrf.mxu0
      %v761 = vadd.f32 0.0, %v760
      %762 = vmatmul.bf16.gmra.mxu0 %v616
      %v763 = vpop.f32.mrf.mxu0
      %v764 = vadd.f32 0.0, %v763
      %v765 = vpop.f32.mrf.mxu0
      %v766 = vadd.f32 0.0, %v765
      %767 = vmatmul.bf16.gmra.mxu0 %v619
      %v768 = vpop.f32.mrf.mxu0
      %v769 = vadd.f32 0.0, %v768
      %v770 = vpop.f32.mrf.mxu0
      %v771 = vadd.f32 0.0, %v770
      %772 = vdwg.mxu0
      %v773 = vpack.c.bf16 %v754, %v754
      %v774 = vpack.c.bf16 %v756, %v756
      %v775 = vpack.c.bf16 %v759, %v759
      %v776 = vpack.c.bf16 %v761, %v761
      %v777 = vpack.c.bf16 %v764, %v764
      %v778 = vpack.c.bf16 %v766, %v766
      %v779 = vpack.c.bf16 %v769, %v769
      %v780 = vpack.c.bf16 %v771, %v771
      %781 = vst.msk [vmem:[%s357] sm:$0xf] %vm658, %v773
      %782 = vst.msk [vmem:[%s357 + $0x4] sm:$0xf] %vm658, %v774
      %783 = vst.msk [vmem:[%s357 + $0x8] sm:$0xf] %vm658, %v775
      %784 = vst.msk [vmem:[%s357 + $0xc] sm:$0xf] %vm658, %v776
      %785 = vst.msk [vmem:[%s357 + $0x10] sm:$0xf] %vm658, %v777
      %786 = vst.msk [vmem:[%s357 + $0x14] sm:$0xf] %vm658, %v778
      %787 = vst.msk [vmem:[%s357 + $0x18] sm:$0xf] %vm658, %v779
      %788 = vst.msk [vmem:[%s357 + $0x1c] sm:$0xf] %vm658, %v780
      %p789 = scmp.lt.s32.totalorder %s21, 1
      %s790 = scalar_select %p789, %s21, 1
      %s791 = smul.addr %s790, 8
      %s792 = smul.addr %s791, 4
      %s793 = scalar_lea.vmem %s7, %s792
      %p794 = scmp.lt.s32.totalorder %s21, 1
      %s795 = scalar_select %p794, %s21, 1
      %s796 = smul.addr %s795, 8
      %s797 = smul.addr %s796, 4
      %s798 = scalar_lea.vmem %s8, %s797
      %p799 = scmp.lt.s32.totalorder %s21, 1
      %s800 = scalar_select %p799, %s21, 1
      %s801 = smul.addr %s800, 8
      %s802 = smul.addr %s801, 4
      %s803 = scalar_lea.vmem %s9, %s802
      // Predicated region
      $region49: #{self_attention.2} parent=47 // pred_check
        %p804 = pneg %p191
      $region50: #{self_attention.2} parent=47 // pred_check_branch
        %806 = sbr.rel (%p804) target = $region52
      $region51: #{self_attention.2} parent=47 // pred_region
        _
      $region52: #{self_attention.2} parent=47 // pred_fallthru
        _
      // Predicated region
      $region53: #{self_attention.2} parent=47 // pred_check
        %p807 = pneg %p217
      $region54: #{self_attention.2} parent=47 // pred_check_branch
        %809 = sbr.rel (%p807) target = $region56
      $region55: #{self_attention.2} parent=47 // pred_region
        _
      $region56: #{self_attention.2} parent=47 // pred_fallthru
        _
      // Predicated region
      $region57: #{self_attention.2} parent=47 // pred_check
        %p810 = pneg %p243
      $region58: #{self_attention.2} parent=47 // pred_check_branch
        %812 = sbr.rel (%p810) target = $region60
      $region59: #{self_attention.2} parent=47 // pred_region
        _
      $region60: #{self_attention.2} parent=47 // pred_fallthru
        _
    $region48: #{self_attention.2} parent=5 // pred_fallthru
      _
    %p813 = scmp.le.s32.totalorder 2, %s16
    // Predicated region
    $region61: #{self_attention.2} parent=5 // pred_check
      %p814 = pneg %p813
    $region62: #{self_attention.2} parent=5 // pred_check_branch
      %816 = sbr.rel (%p814) target = $region64
    $region63: #{self_attention.2} parent=5 // pred_region
      %s817 = ssub.s32 %s16, 2
      // Predicated region
      $region65: #{self_attention.2} parent=63 // pred_check
        %p818 = pneg %p197
      $region66: #{self_attention.2} parent=63 // pred_check_branch
        %820 = sbr.rel (%p818) target = $region68
      $region67: #{self_attention.2} parent=63 // pred_region
        %p821 = scmp.lt.s32.totalorder %s22, 1
        %s822 = scalar_select %p821, %s22, 1
        %s823 = smul.addr %s822, 8
        %s824 = smul.addr %s823, 4
        %s825 = scalar_lea.vmem %s7, %s824
      $region68: #{self_attention.2} parent=63 // pred_fallthru
        _
      // Predicated region
      $region69: #{self_attention.2} parent=63 // pred_check
        %p826 = pneg %p223
      $region70: #{self_attention.2} parent=63 // pred_check_branch
        %828 = sbr.rel (%p826) target = $region72
      $region71: #{self_attention.2} parent=63 // pred_region
        %p829 = scmp.lt.s32.totalorder %s22, 1
        %s830 = scalar_select %p829, %s22, 1
        %s831 = smul.addr %s830, 8
        %s832 = smul.addr %s831, 4
        %s833 = scalar_lea.vmem %s8, %s832
      $region72: #{self_attention.2} parent=63 // pred_fallthru
        _
      // Predicated region
      $region73: #{self_attention.2} parent=63 // pred_check
        %p834 = pneg %p249
      $region74: #{self_attention.2} parent=63 // pred_check_branch
        %836 = sbr.rel (%p834) target = $region76
      $region75: #{self_attention.2} parent=63 // pred_region
        %p837 = scmp.lt.s32.totalorder %s22, 1
        %s838 = scalar_select %p837, %s22, 1
        %s839 = smul.addr %s838, 8
        %s840 = smul.addr %s839, 4
        %s841 = scalar_lea.vmem %s9, %s840
      $region76: #{self_attention.2} parent=63 // pred_fallthru
        _
    $region64: #{self_attention.2} parent=5 // pred_fallthru
      _
  $region6: #{self_attention.2} parent=0 // loop_footer
    %s20 = sadd.s32 1, %s16
  $region7: #{self_attention.2} parent=0 // loop_footer_branch
    %15 = sbr.rel target = $region3
  $region8: #{self_attention.2} parent=0 // loop_exit
    _

// kernel: self_attention.3
$region0: #{self_attention.3}
  #allocation0 [shape = 'u32[]', space=smem, size = 0x4, offset = 0x4, fixed_abs, tag = 'smem constant byte address 0x4 - core index']
  #allocation1 [shape = 'u32[72,128]{1,0:T(1,128)}', space=vmem, size = 0x9000, scoped, tag = 'internal scratch']
  #allocation2 [shape = 'f32[64,1]{1,0:T(8,128)}', space=vmem, size = 0x8000, scoped, tag = 'scratch operand']
  #allocation3 [shape = 'f32[64,1]{1,0:T(8,128)}', space=vmem, size = 0x8000, scoped, tag = 'scratch operand']
  #allocation4 [shape = 'f32[64,32]{1,0:T(8,128)}', space=vmem, size = 0x8000, scoped, tag = 'scratch operand']
  #allocation5 [shape = 'f32[64,32]{1,0:T(8,128)}', space=vmem, size = 0x8000, scoped, tag = 'scratch operand']
  %s0 = inlined_call_operand.vmem [shape: f32[2,64,32], index: 0, kind: input, shape index: {}, may-alias: {0,6}]
  %s1 = inlined_call_operand.vmem [shape: f32[1,32], index: 1, kind: input, shape index: {}]
  %s2 = inlined_call_operand.vmem [shape: bf16[1,32,32], index: 2, kind: input, shape index: {}]
  %s3 = inlined_call_operand.vmem [shape: bf16[2,1,64,32], index: 3, kind: input, shape index: {}]
  %s4 = inlined_call_operand.vmem [shape: bf16[2,1,64,32], index: 4, kind: input, shape index: {}]
  %s5 = inlined_call_operand.vmem [shape: bf16[2,1,64,32], index: 5, kind: input, shape index: {}]
  %s6 = inlined_call_operand.vmem [shape: f32[2,64,32], index: 6, kind: output, shape index: {}, may-alias: {0,6}]
  %s7 = sld [smem:[#allocation0]]
  $region73: #{self_attention.3} parent=0
    _
  %s9 = ssub.s32 1, %s7
  %s10 = scalar_select 0, %s9, %s7
  loop: start=0, step=1, limit=4
  $region2: #{self_attention.3} parent=0 // loop_pre_header
    _
  $region3: #{self_attention.3} parent=0 // loop_header
    %s12 = sphi 0, %s16
    %p13 = scmp.ge.s32.totalorder %s12, 4
    %s19 = sphi 0, %s45
    %s20 = sphi 0, %s41
    %s21 = sphi 0, %s37
    %s22 = sphi 0, %s33
    %s23 = sphi 0, %s19
    %s24 = sphi 0, %s20
    %s25 = sphi 0, %s21
    %s26 = sphi 0, %s22
    %s27 = sphi 0, %s23
    %s28 = sphi 0, %s24
    %s29 = sphi 0, %s25
    %s30 = sphi 0, %s26
    %s50 = sphi 0, %s52
    %s53 = sphi 0, %s50
    %s54 = sphi 0, %s53
    %s70 = sphi 0, %s54
    %s74 = sphi 0, %s74
    %s76 = sphi 0, %s74
    %s77 = sphi 0, %s76
    %s91 = sphi 0, %s77
    %s97 = sphi 0, %s99
    %s100 = sphi 0, %s97
    %s101 = sphi 0, %s100
    %s117 = sphi 0, %s101
    %s127 = sphi 0, %s129
    %s130 = sphi 0, %s127
    %s131 = sphi 0, %s130
    %s147 = sphi 0, %s131
    %s157 = sphi 0, %s159
    %s160 = sphi 0, %s157
    %s161 = sphi 0, %s160
    %s177 = sphi 0, %s161
    %s187 = sphi 0, %s189
    %s190 = sphi 0, %s187
    %s191 = sphi 0, %s190
    %s207 = sphi 0, %s191
    %s215 = sphi 0, %s217
    %s218 = sphi 0, %s215
    %s219 = sphi 0, %s218
    %s235 = sphi 0, %s219
  $region4: #{self_attention.3} parent=0 // loop_header_branch
    %15 = sbr.rel (%p13) target = $region8
  $region5: #{self_attention.3} parent=0 // loop_body
    %s17 = ssub.s32 %s12, 1
    %s18 = ssub.s32 %s12, 2
    %s31 = sadd.s32 1, %s22
    %p32 = scmp.ge.s32.totalorder %s31, 1
    %s33 = scalar_select %p32, 0, %s31
    %s34 = sadd.s32 1, %s21
    %s35 = scalar_select %p32, %s34, %s21
    %p36 = scmp.ge.s32.totalorder %s35, 1
    %s37 = scalar_select %p36, 0, %s35
    %s38 = sadd.s32 1, %s20
    %s39 = scalar_select %p36, %s38, %s20
    %p40 = scmp.ge.s32.totalorder %s39, 1
    %s41 = scalar_select %p40, 0, %s39
    %s42 = sadd.s32 1, %s19
    %s43 = scalar_select %p40, %s42, %s19
    %p44 = scmp.ge.s32.totalorder %s43, 2
    %s45 = scalar_select %p44, 0, %s43
    %s46 = ssub.s32 %s19, %s45
    %s47 = ssub.s32 %s20, %s41
    %s48 = sor.u32 %s46, %s47
    %p49 = scmp.eq.s32.totalorder %s48, 0
    %s51 = sadd.s32 %s50, 1
    %s52 = scalar_select %p49, %s50, %s51
    %p55 = pneg %p49
    %p56 = scmp.eq.s32.totalorder %s12, 1
    %p57 = por %p55, %p56
    %p58 = scmp.ne.s32.totalorder %s50, %s53
    %p59 = scmp.eq.s32.totalorder %s12, 0
    %p60 = por %p58, %p59
    %p61 = scmp.ne.s32.totalorder %s50, %s53
    %p62 = scmp.eq.s32.totalorder %s17, 1
    %p63 = por %p61, %p62
    %p64 = scmp.ne.s32.totalorder %s53, %s54
    %p65 = scmp.eq.s32.totalorder %s17, 0
    %p66 = por %p64, %p65
    %p67 = scmp.ne.s32.totalorder %s53, %s54
    %p68 = scmp.eq.s32.totalorder %s18, 1
    %p69 = por %p67, %p68
    %p71 = scmp.ne.s32.totalorder %s54, %s70
    %p72 = scmp.eq.s32.totalorder %s18, 0
    %p73 = por %p71, %p72
    %s75 = sadd.s32 %s74, 1
    %p78 = scmp.eq.s32.totalorder %s12, 1
    %p79 = scmp.ne.s32.totalorder %s74, %s76
    %p80 = scmp.eq.s32.totalorder %s12, 0
    %p81 = por %p79, %p80
    %p82 = scmp.ne.s32.totalorder %s74, %s76
    %p83 = scmp.eq.s32.totalorder %s17, 1
    %p84 = por %p82, %p83
    %p85 = scmp.ne.s32.totalorder %s76, %s77
    %p86 = scmp.eq.s32.totalorder %s17, 0
    %p87 = por %p85, %p86
    %p88 = scmp.ne.s32.totalorder %s76, %s77
    %p89 = scmp.eq.s32.totalorder %s18, 1
    %p90 = por %p88, %p89
    %p92 = scmp.ne.s32.totalorder %s77, %s91
    %p93 = scmp.eq.s32.totalorder %s18, 0
    %p94 = por %p92, %p93
    %s95 = ssub.s32 %s21, %s37
    %p96 = scmp.eq.s32.totalorder %s95, 0
    %s98 = sadd.s32 %s97, 1
    %s99 = scalar_select %p96, %s97, %s98
    %p102 = pneg %p96
    %p103 = scmp.eq.s32.totalorder %s12, 1
    %p104 = por %p102, %p103
    %p105 = scmp.ne.s32.totalorder %s97, %s100
    %p106 = scmp.eq.s32.totalorder %s12, 0
    %p107 = por %p105, %p106
    %p108 = scmp.ne.s32.totalorder %s97, %s100
    %p109 = scmp.eq.s32.totalorder %s17, 1
    %p110 = por %p108, %p109
    %p111 = scmp.ne.s32.totalorder %s100, %s101
    %p112 = scmp.eq.s32.totalorder %s17, 0
    %p113 = por %p111, %p112
    %p114 = scmp.ne.s32.totalorder %s100, %s101
    %p115 = scmp.eq.s32.totalorder %s18, 1
    %p116 = por %p114, %p115
    %p118 = scmp.ne.s32.totalorder %s101, %s117
    %p119 = scmp.eq.s32.totalorder %s18, 0
    %p120 = por %p118, %p119
    %s121 = ssub.s32 %s19, %s45
    %s122 = ssub.s32 %s21, %s37
    %s123 = sor.u32 %s121, %s122
    %s124 = ssub.s32 %s20, %s41
    %s125 = sor.u32 %s123, %s124
    %p126 = scmp.eq.s32.totalorder %s125, 0
    %s128 = sadd.s32 %s127, 1
    %s129 = scalar_select %p126, %s127, %s128
    %p132 = pneg %p126
    %p133 = scmp.eq.s32.totalorder %s12, 1
    %p134 = por %p132, %p133
    %p135 = scmp.ne.s32.totalorder %s127, %s130
    %p136 = scmp.eq.s32.totalorder %s12, 0
    %p137 = por %p135, %p136
    %p138 = scmp.ne.s32.totalorder %s127, %s130
    %p139 = scmp.eq.s32.totalorder %s17, 1
    %p140 = por %p138, %p139
    %p141 = scmp.ne.s32.totalorder %s130, %s131
    %p142 = scmp.eq.s32.totalorder %s17, 0
    %p143 = por %p141, %p142
    %p144 = scmp.ne.s32.totalorder %s130, %s131
    %p145 = scmp.eq.s32.totalorder %s18, 1
    %p146 = por %p144, %p145
    %p148 = scmp.ne.s32.totalorder %s131, %s147
    %p149 = scmp.eq.s32.totalorder %s18, 0
    %p150 = por %p148, %p149
    %s151 = ssub.s32 %s19, %s45
    %s152 = ssub.s32 %s21, %s37
    %s153 = sor.u32 %s151, %s152
    %s154 = ssub.s32 %s22, %s33
    %s155 = sor.u32 %s153, %s154
    %p156 = scmp.eq.s32.totalorder %s155, 0
    %s158 = sadd.s32 %s157, 1
    %s159 = scalar_select %p156, %s157, %s158
    %p162 = pneg %p156
    %p163 = scmp.eq.s32.totalorder %s12, 1
    %p164 = por %p162, %p163
    %p165 = scmp.ne.s32.totalorder %s157, %s160
    %p166 = scmp.eq.s32.totalorder %s12, 0
    %p167 = por %p165, %p166
    %p168 = scmp.ne.s32.totalorder %s157, %s160
    %p169 = scmp.eq.s32.totalorder %s17, 1
    %p170 = por %p168, %p169
    %p171 = scmp.ne.s32.totalorder %s160, %s161
    %p172 = scmp.eq.s32.totalorder %s17, 0
    %p173 = por %p171, %p172
    %p174 = scmp.ne.s32.totalorder %s160, %s161
    %p175 = scmp.eq.s32.totalorder %s18, 1
    %p176 = por %p174, %p175
    %p178 = scmp.ne.s32.totalorder %s161, %s177
    %p179 = scmp.eq.s32.totalorder %s18, 0
    %p180 = por %p178, %p179
    %s181 = ssub.s32 %s19, %s45
    %s182 = ssub.s32 %s21, %s37
    %s183 = sor.u32 %s181, %s182
    %s184 = ssub.s32 %s22, %s33
    %s185 = sor.u32 %s183, %s184
    %p186 = scmp.eq.s32.totalorder %s185, 0
    %s188 = sadd.s32 %s187, 1
    %s189 = scalar_select %p186, %s187, %s188
    %p192 = pneg %p186
    %p193 = scmp.eq.s32.totalorder %s12, 1
    %p194 = por %p192, %p193
    %p195 = scmp.ne.s32.totalorder %s187, %s190
    %p196 = scmp.eq.s32.totalorder %s12, 0
    %p197 = por %p195, %p196
    %p198 = scmp.ne.s32.totalorder %s187, %s190
    %p199 = scmp.eq.s32.totalorder %s17, 1
    %p200 = por %p198, %p199
    %p201 = scmp.ne.s32.totalorder %s190, %s191
    %p202 = scmp.eq.s32.totalorder %s17, 0
    %p203 = por %p201, %p202
    %p204 = scmp.ne.s32.totalorder %s190, %s191
    %p205 = scmp.eq.s32.totalorder %s18, 1
    %p206 = por %p204, %p205
    %p208 = scmp.ne.s32.totalorder %s191, %s207
    %p209 = scmp.eq.s32.totalorder %s18, 0
    %p210 = por %p208, %p209
    %s211 = ssub.s32 %s19, %s45
    %s212 = ssub.s32 %s20, %s41
    %s213 = sor.u32 %s211, %s212
    %p214 = scmp.eq.s32.totalorder %s213, 0
    %s216 = sadd.s32 %s215, 1
    %s217 = scalar_select %p214, %s215, %s216
    %p220 = pneg %p214
    %p221 = scmp.eq.s32.totalorder %s12, 1
    %p222 = por %p220, %p221
    %p223 = scmp.ne.s32.totalorder %s215, %s218
    %p224 = scmp.eq.s32.totalorder %s12, 0
    %p225 = por %p223, %p224
    %p226 = scmp.ne.s32.totalorder %s215, %s218
    %p227 = scmp.eq.s32.totalorder %s17, 1
    %p228 = por %p226, %p227
    %p229 = scmp.ne.s32.totalorder %s218, %s219
    %p230 = scmp.eq.s32.totalorder %s17, 0
    %p231 = por %p229, %p230
    %p232 = scmp.ne.s32.totalorder %s218, %s219
    %p233 = scmp.eq.s32.totalorder %s18, 1
    %p234 = por %p232, %p233
    %p236 = scmp.ne.s32.totalorder %s219, %s235
    %p237 = scmp.eq.s32.totalorder %s18, 0
    %p238 = por %p236, %p237
    %p239 = scmp.le.s32.totalorder 1, %s12
    %p240 = scmp.lt.s32.totalorder %s12, 3
    %p241 = pnand %p239, %p240
    %p242 = pneg %p241
    // Predicated region
    $region9: #{self_attention.3} parent=5 // pred_check
      _
    $region10: #{self_attention.3} parent=5 // pred_check_branch
      %244 = sbr.rel (%p241) target = $region12
    $region11: #{self_attention.3} parent=5 // pred_region
      %s245 = ssub.s32 %s12, 1
      // Predicated region
      $region13: #{self_attention.3} parent=11 // pred_check
        %p246 = pneg %p87
      $region14: #{self_attention.3} parent=11 // pred_check_branch
        %248 = sbr.rel (%p246) target = $region16
      $region15: #{self_attention.3} parent=11 // pred_region
        _
      $region16: #{self_attention.3} parent=11 // pred_fallthru
        _
      // Predicated region
      $region17: #{self_attention.3} parent=11 // pred_check
        %p249 = pneg %p113
      $region18: #{self_attention.3} parent=11 // pred_check_branch
        %251 = sbr.rel (%p249) target = $region20
      $region19: #{self_attention.3} parent=11 // pred_region
        %p252 = scmp.lt.s32.totalorder %s25, 0
        %s253 = scalar_select %p252, %s25, 0
        %s254 = smul.addr %s253, 4
        %s255 = smul.addr %s254, 4
        %s256 = scalar_lea.vmem %s2, %s255
      $region20: #{self_attention.3} parent=11 // pred_fallthru
        _
    $region12: #{self_attention.3} parent=5 // pred_fallthru
      _
    %p257 = scmp.lt.s32.totalorder %s12, 2
    // Predicated region
    $region21: #{self_attention.3} parent=5 // pred_check
      %p258 = pneg %p257
    $region22: #{self_attention.3} parent=5 // pred_check_branch
      %260 = sbr.rel (%p258) target = $region24
    $region23: #{self_attention.3} parent=5 // pred_region
      // Predicated region
      $region25: #{self_attention.3} parent=23 // pred_check
        %p261 = pneg %p60
      $region26: #{self_attention.3} parent=23 // pred_check_branch
        %263 = sbr.rel (%p261) target = $region28
      $region27: #{self_attention.3} parent=23 // pred_region
        %s264 = smul.u32 8, %s20
        %p265 = scmp.lt.s32.totalorder %s19, 1
        %s266 = scalar_select %p265, %s19, 1
        %p267 = scmp.lt.s32.totalorder %s264, 7
        %s268 = scalar_select %p267, %s264, 7
        %s269 = smul.addr %s266, 8
        %s270 = sadd.s32 %s268, %s269
        %s271 = smul.addr %s270, 8
        %s272 = scalar_lea.vmem %s0, %s271
        %s273 = smul.u32 8, %s20
      $region28: #{self_attention.3} parent=23 // pred_fallthru
        _
      // Predicated region
      $region29: #{self_attention.3} parent=23 // pred_check
        %p274 = pneg %p137
      $region30: #{self_attention.3} parent=23 // pred_check_branch
        %276 = sbr.rel (%p274) target = $region32
      $region31: #{self_attention.3} parent=23 // pred_region
        %s277 = smul.u32 8, %s20
        %p278 = scmp.lt.s32.totalorder %s19, 1
        %s279 = scalar_select %p278, %s19, 1
        %p280 = scmp.lt.s32.totalorder %s21, 0
        %s281 = scalar_select %p280, %s21, 0
        %p282 = scmp.lt.s32.totalorder %s277, 7
        %s283 = scalar_select %p282, %s277, 7
        %s284 = smul.addr %s281, 8
        %s285 = sadd.s32 %s283, %s284
        %s286 = smul.addr %s279, 8
        %s287 = sadd.s32 %s285, %s286
        %s288 = smul.addr %s287, 4
        %s289 = scalar_lea.vmem %s3, %s288
        %s290 = smul.u32 8, %s20
      $region32: #{self_attention.3} parent=23 // pred_fallthru
        _
      // Predicated region
      $region33: #{self_attention.3} parent=23 // pred_check
        %p291 = pneg %p167
      $region34: #{self_attention.3} parent=23 // pred_check_branch
        %293 = sbr.rel (%p291) target = $region36
      $region35: #{self_attention.3} parent=23 // pred_region
        %s294 = smul.u32 8, %s22
        %p295 = scmp.lt.s32.totalorder %s19, 1
        %s296 = scalar_select %p295, %s19, 1
        %p297 = scmp.lt.s32.totalorder %s21, 0
        %s298 = scalar_select %p297, %s21, 0
        %p299 = scmp.lt.s32.totalorder %s294, 7
        %s300 = scalar_select %p299, %s294, 7
        %s301 = smul.addr %s298, 8
        %s302 = sadd.s32 %s300, %s301
        %s303 = smul.addr %s296, 8
        %s304 = sadd.s32 %s302, %s303
        %s305 = smul.addr %s304, 4
        %s306 = scalar_lea.vmem %s4, %s305
        %s307 = smul.u32 8, %s22
      $region36: #{self_attention.3} parent=23 // pred_fallthru
        _
      // Predicated region
      $region37: #{self_attention.3} parent=23 // pred_check
        %p308 = pneg %p197
      $region38: #{self_attention.3} parent=23 // pred_check_branch
        %310 = sbr.rel (%p308) target = $region40
      $region39: #{self_attention.3} parent=23 // pred_region
        %s311 = smul.u32 8, %s22
        %p312 = scmp.lt.s32.totalorder %s19, 1
        %s313 = scalar_select %p312, %s19, 1
        %p314 = scmp.lt.s32.totalorder %s21, 0
        %s315 = scalar_select %p314, %s21, 0
        %p316 = scmp.lt.s32.totalorder %s311, 7
        %s317 = scalar_select %p316, %s311, 7
        %s318 = smul.addr %s315, 8
        %s319 = sadd.s32 %s317, %s318
        %s320 = smul.addr %s313, 8
        %s321 = sadd.s32 %s319, %s320
        %s322 = smul.addr %s321, 4
        %s323 = scalar_lea.vmem %s5, %s322
        %s324 = smul.u32 8, %s22
      $region40: #{self_attention.3} parent=23 // pred_fallthru
        _
    $region24: #{self_attention.3} parent=5 // pred_fallthru
      _
    %p325 = scmp.le.s32.totalorder 1, %s12
    %p326 = scmp.lt.s32.totalorder %s12, 3
    %p327 = pnand %p325, %p326
    %p328 = pneg %p327
    // Predicated region
    $region41: #{self_attention.3} parent=5 // pred_check
      _
    $region42: #{self_attention.3} parent=5 // pred_check_branch
      %330 = sbr.rel (%p327) target = $region44
    $region43: #{self_attention.3} parent=5 // pred_region
      %s331 = ssub.s32 %s12, 1
      %s332 = smul.u32 8, %s24
      %p333 = scmp.lt.s32.totalorder %s23, 1
      %s334 = scalar_select %p333, %s23, 1
      %p335 = scmp.lt.s32.totalorder %s332, 7
      %s336 = scalar_select %p335, %s332, 7
      %s337 = smul.addr %s334, 8
      %s338 = sadd.s32 %s336, %s337
      %s339 = smul.addr %s338, 8
      %s340 = scalar_lea.vmem %s0, %s339
      %p341 = pneg %p66
      %p342 = pneg %p63
      %p343 = pneg %p87
      %p344 = pneg %p84
      %p345 = scmp.lt.s32.totalorder %s25, 0
      %s346 = scalar_select %p345, %s25, 0
      %s347 = smul.addr %s346, 4
      %s348 = smul.addr %s347, 4
      %s349 = scalar_lea.vmem %s2, %s348
      %p350 = pneg %p113
      %p351 = pneg %p110
      %s352 = smul.u32 8, %s24
      %p353 = scmp.lt.s32.totalorder %s23, 1
      %s354 = scalar_select %p353, %s23, 1
      %p355 = scmp.lt.s32.totalorder %s25, 0
      %s356 = scalar_select %p355, %s25, 0
      %p357 = scmp.lt.s32.totalorder %s352, 7
      %s358 = scalar_select %p357, %s352, 7
      %s359 = smul.addr %s356, 8
      %s360 = sadd.s32 %s358, %s359
      %s361 = smul.addr %s354, 8
      %s362 = sadd.s32 %s360, %s361
      %s363 = smul.addr %s362, 4
      %s364 = scalar_lea.vmem %s3, %s363
      %p365 = pneg %p143
      %p366 = pneg %p140
      %s367 = smul.u32 8, %s26
      %p368 = scmp.lt.s32.totalorder %s23, 1
      %s369 = scalar_select %p368, %s23, 1
      %p370 = scmp.lt.s32.totalorder %s25, 0
      %s371 = scalar_select %p370, %s25, 0
      %p372 = scmp.lt.s32.totalorder %s367, 7
      %s373 = scalar_select %p372, %s367, 7
      %s374 = smul.addr %s371, 8
      %s375 = sadd.s32 %s373, %s374
      %s376 = smul.addr %s369, 8
      %s377 = sadd.s32 %s375, %s376
      %s378 = smul.addr %s377, 4
      %s379 = scalar_lea.vmem %s4, %s378
      %p380 = pneg %p173
      %p381 = pneg %p170
      %s382 = smul.u32 8, %s26
      %p383 = scmp.lt.s32.totalorder %s23, 1
      %s384 = scalar_select %p383, %s23, 1
      %p385 = scmp.lt.s32.totalorder %s25, 0
      %s386 = scalar_select %p385, %s25, 0
      %p387 = scmp.lt.s32.totalorder %s382, 7
      %s388 = scalar_select %p387, %s382, 7
      %s389 = smul.addr %s386, 8
      %s390 = sadd.s32 %s388, %s389
      %s391 = smul.addr %s384, 8
      %s392 = sadd.s32 %s390, %s391
      %s393 = smul.addr %s392, 4
      %s394 = scalar_lea.vmem %s5, %s393
      %p395 = pneg %p203
      %p396 = pneg %p200
      %p397 = pneg %p231
      %p398 = pneg %p228
      %s399 = smul.u32 8, %s24
      %p400 = scmp.lt.s32.totalorder %s23, 1
      %s401 = scalar_select %p400, %s23, 1
      %p402 = scmp.lt.s32.totalorder %s399, 7
      %s403 = scalar_select %p402, %s399, 7
      %s404 = smul.addr %s401, 8
      %s405 = sadd.s32 %s403, %s404
      %s406 = smul.addr %s405, 8
      %s407 = scalar_lea.vmem %s6, %s406
      %s408 = smul.u32 8, %s24
      %p409 = scmp.lt.s32.totalorder %s23, 1
      %s410 = scalar_select %p409, %s23, 1
      %p411 = scmp.lt.s32.totalorder %s408, 7
      %s412 = scalar_select %p411, %s408, 7
      %s413 = smul.addr %s410, 8
      %s414 = sadd.s32 %s412, %s413
      %s415 = smul.addr %s414, 8
      %s416 = scalar_lea.vmem %s0, %s415
      %s417 = smul.u32 8, %s24
      %p418 = scmp.lt.s32.totalorder %s25, 0
      %s419 = scalar_select %p418, %s25, 0
      %s420 = smul.addr %s419, 4
      %s421 = smul.addr %s420, 4
      %s422 = scalar_lea.vmem %s2, %s421
      %s423 = smul.u32 8, %s24
      %p424 = scmp.lt.s32.totalorder %s23, 1
      %s425 = scalar_select %p424, %s23, 1
      %p426 = scmp.lt.s32.totalorder %s25, 0
      %s427 = scalar_select %p426, %s25, 0
      %p428 = scmp.lt.s32.totalorder %s423, 7
      %s429 = scalar_select %p428, %s423, 7
      %s430 = smul.addr %s427, 8
      %s431 = sadd.s32 %s429, %s430
      %s432 = smul.addr %s425, 8
      %s433 = sadd.s32 %s431, %s432
      %s434 = smul.addr %s433, 4
      %s435 = scalar_lea.vmem %s3, %s434
      %s436 = smul.u32 8, %s24
      %s437 = smul.u32 8, %s26
      %p438 = scmp.lt.s32.totalorder %s23, 1
      %s439 = scalar_select %p438, %s23, 1
      %p440 = scmp.lt.s32.totalorder %s25, 0
      %s441 = scalar_select %p440, %s25, 0
      %p442 = scmp.lt.s32.totalorder %s437, 7
      %s443 = scalar_select %p442, %s437, 7
      %s444 = smul.addr %s441, 8
      %s445 = sadd.s32 %s443, %s444
      %s446 = smul.addr %s439, 8
      %s447 = sadd.s32 %s445, %s446
      %s448 = smul.addr %s447, 4
      %s449 = scalar_lea.vmem %s4, %s448
      %s450 = smul.u32 8, %s26
      %s451 = smul.u32 8, %s26
      %p452 = scmp.lt.s32.totalorder %s23, 1
      %s453 = scalar_select %p452, %s23, 1
      %p454 = scmp.lt.s32.totalorder %s25, 0
      %s455 = scalar_select %p454, %s25, 0
      %p456 = scmp.lt.s32.totalorder %s451, 7
      %s457 = scalar_select %p456, %s451, 7
      %s458 = smul.addr %s455, 8
      %s459 = sadd.s32 %s457, %s458
      %s460 = smul.addr %s453, 8
      %s461 = sadd.s32 %s459, %s460
      %s462 = smul.addr %s461, 4
      %s463 = scalar_lea.vmem %s5, %s462
      %s464 = smul.u32 8, %s26
      %s465 = smul.u32 8, %s24
      %p466 = scmp.lt.s32.totalorder %s23, 1
      %s467 = scalar_select %p466, %s23, 1
      %p468 = scmp.lt.s32.totalorder %s465, 7
      %s469 = scalar_select %p468, %s465, 7
      %s470 = smul.addr %s467, 8
      %s471 = sadd.s32 %s469, %s470
      %s472 = smul.addr %s471, 8
      %s473 = scalar_lea.vmem %s6, %s472
      %s474 = smul.u32 8, %s24
      %p476 = scmp.eq.s32.totalorder %s25, 0
      %p477 = scmp.eq.s32.totalorder %s26, 0
      %p478 = pnand %p476, %p477
      %p479 = pneg %p478
      // Predicated region
      $region45: #{self_attention.3} parent=43 // pred_check
        _
      $region46: #{self_attention.3} parent=43 // pred_check_branch
        %481 = sbr.rel (%p478) target = $region48
      $region47: #{self_attention.3} parent=43 // pred_region
        %v482 = vld [vmem:[%s416] sm:$0xff]
        %v483 = vld [vmem:[%s416 + $0x8] sm:$0xff]
        %v484 = vld [vmem:[%s416 + $0x10] sm:$0xff]
        %v485 = vld [vmem:[%s416 + $0x18] sm:$0xff]
        %v486 = vld [vmem:[%s416 + $0x20] sm:$0xff]
        %v487 = vld [vmem:[%s416 + $0x28] sm:$0xff]
        %v488 = vld [vmem:[%s416 + $0x30] sm:$0xff]
        %v489 = vld [vmem:[%s416 + $0x38] sm:$0xff]
        %v490 = vld [vmem:[%s1] sm:$0x1]
        %v492 = vperm.slane %v490, 0
        %v494 = vadd.f32 %v482, %v492
        %v495 = vadd.f32 %v483, %v492
        %v496 = vadd.f32 %v484, %v492
        %v497 = vadd.f32 %v485, %v492
        %v498 = vadd.f32 %v486, %v492
        %v499 = vadd.f32 %v487, %v492
        %v500 = vadd.f32 %v488, %v492
        %v501 = vadd.f32 %v489, %v492
        %vm502 = vcmask 261120
        %503 = vst.msk [vmem:[#allocation5] sm:$0xff] %vm502, %v494
        %504 = vst.msk [vmem:[#allocation5 + $0x8] sm:$0xff] %vm502, %v495
        %505 = vst.msk [vmem:[#allocation5 + $0x10] sm:$0xff] %vm502, %v496
        %506 = vst.msk [vmem:[#allocation5 + $0x18] sm:$0xff] %vm502, %v497
        %507 = vst.msk [vmem:[#allocation5 + $0x20] sm:$0xff] %vm502, %v498
        %508 = vst.msk [vmem:[#allocation5 + $0x28] sm:$0xff] %vm502, %v499
        %509 = vst.msk [vmem:[#allocation5 + $0x30] sm:$0xff] %vm502, %v500
        %510 = vst.msk [vmem:[#allocation5 + $0x38] sm:$0xff] %vm502, %v501
      $region48: #{self_attention.3} parent=43 // pred_fallthru
        _
      // Predicated region
      $region49: #{self_attention.3} parent=43 // pred_check
        %p511 = pneg %p477
      $region50: #{self_attention.3} parent=43 // pred_check_branch
        %513 = sbr.rel (%p511) target = $region52
      $region51: #{self_attention.3} parent=43 // pred_region
        %vm514 = vcmask 7168
        %515 = vst.msk [vmem:[#allocation2] sm:$0xff] %vm514, -inf
        %516 = vst.msk [vmem:[#allocation2 + $0x8] sm:$0xff] %vm514, -inf
        %517 = vst.msk [vmem:[#allocation2 + $0x10] sm:$0xff] %vm514, -inf
        %518 = vst.msk [vmem:[#allocation2 + $0x18] sm:$0xff] %vm514, -inf
        %519 = vst.msk [vmem:[#allocation2 + $0x20] sm:$0xff] %vm514, -inf
        %520 = vst.msk [vmem:[#allocation2 + $0x28] sm:$0xff] %vm514, -inf
        %521 = vst.msk [vmem:[#allocation2 + $0x30] sm:$0xff] %vm514, -inf
        %522 = vst.msk [vmem:[#allocation2 + $0x38] sm:$0xff] %vm514, -inf
        %523 = vst.msk [vmem:[#allocation3] sm:$0xff] %vm514, 0.0
        %524 = vst.msk [vmem:[#allocation3 + $0x8] sm:$0xff] %vm514, 0.0
        %525 = vst.msk [vmem:[#allocation3 + $0x10] sm:$0xff] %vm514, 0.0
        %526 = vst.msk [vmem:[#allocation3 + $0x18] sm:$0xff] %vm514, 0.0
        %527 = vst.msk [vmem:[#allocation3 + $0x20] sm:$0xff] %vm514, 0.0
        %528 = vst.msk [vmem:[#allocation3 + $0x28] sm:$0xff] %vm514, 0.0
        %529 = vst.msk [vmem:[#allocation3 + $0x30] sm:$0xff] %vm514, 0.0
        %530 = vst.msk [vmem:[#allocation3 + $0x38] sm:$0xff] %vm514, 0.0
        %vm531 = vcmask 261120
        %532 = vst.msk [vmem:[#allocation4] sm:$0xff] %vm531, 0.0
        %533 = vst.msk [vmem:[#allocation4 + $0x8] sm:$0xff] %vm531, 0.0
        %534 = vst.msk [vmem:[#allocation4 + $0x10] sm:$0xff] %vm531, 0.0
        %535 = vst.msk [vmem:[#allocation4 + $0x18] sm:$0xff] %vm531, 0.0
        %536 = vst.msk [vmem:[#allocation4 + $0x20] sm:$0xff] %vm531, 0.0
        %537 = vst.msk [vmem:[#allocation4 + $0x28] sm:$0xff] %vm531, 0.0
        %538 = vst.msk [vmem:[#allocation4 + $0x30] sm:$0xff] %vm531, 0.0
        %539 = vst.msk [vmem:[#allocation4 + $0x38] sm:$0xff] %vm531, 0.0
      $region52: #{self_attention.3} parent=43 // pred_fallthru
        _
      %v540 = vld [vmem:[%s435] sm:$0xf]
      %v541 = vld [vmem:[%s435 + $0x4] sm:$0xf]
      %v542 = vld [vmem:[%s435 + $0x8] sm:$0xf]
      %v543 = vld [vmem:[%s435 + $0xc] sm:$0xf]
      %v544 = vld [vmem:[%s435 + $0x10] sm:$0xf]
      %v545 = vld [vmem:[%s435 + $0x14] sm:$0xf]
      %v546 = vld [vmem:[%s435 + $0x18] sm:$0xf]
      %v547 = vld [vmem:[%s435 + $0x1c] sm:$0xf]
      %v548 = vld [vmem:[%s449] sm:$0xf]
      %v549 = vld [vmem:[%s449 + $0x4] sm:$0xf]
      %v550 = vld [vmem:[%s449 + $0x8] sm:$0xf]
      %v551 = vld [vmem:[%s449 + $0xc] sm:$0xf]
      %v552 = vld [vmem:[%s449 + $0x10] sm:$0xf]
      %v553 = vld [vmem:[%s449 + $0x14] sm:$0xf]
      %v554 = vld [vmem:[%s449 + $0x18] sm:$0xf]
      %v555 = vld [vmem:[%s449 + $0x1c] sm:$0xf]
      %v556 = vld [vmem:[%s463] sm:$0xf]
      %v557 = vld [vmem:[%s463 + $0x4] sm:$0xf]
      %v558 = vld [vmem:[%s463 + $0x8] sm:$0xf]
      %v559 = vld [vmem:[%s463 + $0xc] sm:$0xf]
      %v560 = vld [vmem:[%s463 + $0x10] sm:$0xf]
      %v561 = vld [vmem:[%s463 + $0x14] sm:$0xf]
      %v562 = vld [vmem:[%s463 + $0x18] sm:$0xf]
      %v563 = vld [vmem:[%s463 + $0x1c] sm:$0xf]
      %v572 = vunpack.c.l.b16 %v540
      %v573 = vunpack.c.l.b16 %v541
      %v574 = vunpack.c.l.b16 %v542
      %v575 = vunpack.c.l.b16 %v543
      %v576 = vunpack.c.l.b16 %v544
      %v577 = vunpack.c.l.b16 %v545
      %v578 = vunpack.c.l.b16 %v546
      %v579 = vunpack.c.l.b16 %v547
      %v580 = vpack.c.b16 %v573, %v572
      %v581 = vpack.c.b16 %v575, %v574
      %v582 = vpack.c.b16 %v577, %v576
      %v583 = vpack.c.b16 %v579, %v578
      %v592 = vunpack.c.l.b16 %v548
      %v593 = vunpack.c.l.b16 %v549
      %v594 = vunpack.c.l.b16 %v550
      %v595 = vunpack.c.l.b16 %v551
      %v596 = vunpack.c.l.b16 %v552
      %v597 = vunpack.c.l.b16 %v553
      %v598 = vunpack.c.l.b16 %v554
      %v599 = vunpack.c.l.b16 %v555
      %v600 = vpack.c.b16 %v593, %v592
      %v601 = vpack.c.b16 %v595, %v594
      %v602 = vpack.c.b16 %v597, %v596
      %v603 = vpack.c.b16 %v599, %v598
      %vm604 = vcmask 261120
      %v606 = vsel %vm604, %v580, 0
      %v609 = vsel %vm604, %v581, 0
      %v612 = vsel %vm604, %v582, 0
      %v615 = vsel %vm604, %v583, 0
      %v618 = vsel %vm604, %v600, 0
      %v621 = vsel %vm604, %v601, 0
      %v624 = vsel %vm604, %v602, 0
      %v627 = vsel %vm604, %v603, 0
      %629 = vmatpush.bf16.xpose.msra.mxu0 0
      %630 = vmatpush.bf16.xpose.msra.mxu0 0
      %631 = vmatpush.bf16.xpose.msra.mxu0 0
      %632 = vmatpush.bf16.xpose.msra.mxu0 0
      %633 = vmatpush.bf16.xpose.msra.mxu0 %v627
      %634 = vmatpush.bf16.xpose.msra.mxu0 %v624
      %635 = vmatpush.bf16.xpose.msra.mxu0 %v621
      %636 = vmatpush.bf16.xpose.msra.mxu0 %v618
      %637 = vmatmul.bf16.gmra.mxu0 %v606
      %v638 = vpop.f32.mrf.mxu0
      %v639 = vadd.f32 0.0, %v638
      %v640 = vpop.f32.mrf.mxu0
      %v641 = vadd.f32 0.0, %v640
      %642 = vmatmul.bf16.gmra.mxu0 %v609
      %v643 = vpop.f32.mrf.mxu0
      %v644 = vadd.f32 0.0, %v643
      %v645 = vpop.f32.mrf.mxu0
      %v646 = vadd.f32 0.0, %v645
      %647 = vmatmul.bf16.gmra.mxu0 %v612
      %v648 = vpop.f32.mrf.mxu0
      %v649 = vadd.f32 0.0, %v648
      %v650 = vpop.f32.mrf.mxu0
      %v651 = vadd.f32 0.0, %v650
      %652 = vmatmul.bf16.gmra.mxu0 %v615
      %v653 = vpop.f32.mrf.mxu0
      %v654 = vadd.f32 0.0, %v653
      %v655 = vpop.f32.mrf.mxu0
      %v656 = vadd.f32 0.0, %v655
      %657 = vdwg.mxu0
      %v658 = vld [vmem:[#allocation2] sm:$0xff]
      %v659 = vld [vmem:[#allocation2 + $0x8] sm:$0xff]
      %v660 = vld [vmem:[#allocation2 + $0x10] sm:$0xff]
      %v661 = vld [vmem:[#allocation2 + $0x18] sm:$0xff]
      %v662 = vld [vmem:[#allocation2 + $0x20] sm:$0xff]
      %v663 = vld [vmem:[#allocation2 + $0x28] sm:$0xff]
      %v664 = vld [vmem:[#allocation2 + $0x30] sm:$0xff]
      %v665 = vld [vmem:[#allocation2 + $0x38] sm:$0xff]
      %vm666 = vcmask 523264
      %v667 = vsel %vm666, %v639, -inf
      %668 = vmax.xlane.f32.xlu0 %v667
      %v669 = vpop.xlane.xlu0 %668
      %v670 = vsel %vm666, %v641, -inf
      %671 = vmax.xlane.f32.xlu0 %v670
      %v672 = vpop.xlane.xlu0 %671
      %v673 = vsel %vm666, %v644, -inf
      %674 = vmax.xlane.f32.xlu0 %v673
      %v675 = vpop.xlane.xlu0 %674
      %v676 = vsel %vm666, %v646, -inf
      %677 = vmax.xlane.f32.xlu0 %v676
      %v678 = vpop.xlane.xlu0 %677
      %v679 = vsel %vm666, %v649, -inf
      %680 = vmax.xlane.f32.xlu0 %v679
      %v681 = vpop.xlane.xlu0 %680
      %v682 = vsel %vm666, %v651, -inf
      %683 = vmax.xlane.f32.xlu0 %v682
      %v684 = vpop.xlane.xlu0 %683
      %v685 = vsel %vm666, %v654, -inf
      %686 = vmax.xlane.f32.xlu0 %v685
      %v687 = vpop.xlane.xlu0 %686
      %v688 = vsel %vm666, %v656, -inf
      %689 = vmax.xlane.f32.xlu0 %v688
      %v690 = vpop.xlane.xlu0 %689
      %v691 = vmax.f32 %v658, %v669
      %v692 = vmax.f32 %v659, %v672
      %v693 = vmax.f32 %v660, %v675
      %v694 = vmax.f32 %v661, %v678
      %v695 = vmax.f32 %v662, %v681
      %v696 = vmax.f32 %v663, %v684
      %v697 = vmax.f32 %v664, %v687
      %v698 = vmax.f32 %v665, %v690
      %v699 = vsub.f32 %v658, %v691
      %v700 = vsub.f32 %v659, %v692
      %v701 = vsub.f32 %v660, %v693
      %v702 = vsub.f32 %v661, %v694
      %v703 = vsub.f32 %v662, %v695
      %v704 = vsub.f32 %v663, %v696
      %v705 = vsub.f32 %v664, %v697
      %v706 = vsub.f32 %v665, %v698
      %v707 = vmul.f32 %v699, 1.442695
      %v708 = vpow.pop %v707
      %v709 = vmul.f32 %v700, 1.442695
      %v710 = vpow.pop %v709
      %v711 = vmul.f32 %v701, 1.442695
      %v712 = vpow.pop %v711
      %v713 = vmul.f32 %v702, 1.442695
      %v714 = vpow.pop %v713
      %v715 = vmul.f32 %v703, 1.442695
      %v716 = vpow.pop %v715
      %v717 = vmul.f32 %v704, 1.442695
      %v718 = vpow.pop %v717
      %v719 = vmul.f32 %v705, 1.442695
      %v720 = vpow.pop %v719
      %v721 = vmul.f32 %v706, 1.442695
      %v722 = vpow.pop %v721
      %724 = vset.pattern.permute.xlu0 0
      %725 = vperm.xlu0 %724, %v691
      %v726 = vpop.permute.xlu0 %725
      %729 = vset.pattern.permute.xlu0 0
      %730 = vperm.xlu0 %729, %v692
      %v731 = vpop.permute.xlu0 %730
      %734 = vset.pattern.permute.xlu0 0
      %735 = vperm.xlu0 %734, %v693
      %v736 = vpop.permute.xlu0 %735
      %739 = vset.pattern.permute.xlu0 0
      %740 = vperm.xlu0 %739, %v694
      %v741 = vpop.permute.xlu0 %740
      %744 = vset.pattern.permute.xlu0 0
      %745 = vperm.xlu0 %744, %v695
      %v746 = vpop.permute.xlu0 %745
      %749 = vset.pattern.permute.xlu0 0
      %750 = vperm.xlu0 %749, %v696
      %v751 = vpop.permute.xlu0 %750
      %754 = vset.pattern.permute.xlu0 0
      %755 = vperm.xlu0 %754, %v697
      %v756 = vpop.permute.xlu0 %755
      %759 = vset.pattern.permute.xlu0 0
      %760 = vperm.xlu0 %759, %v698
      %v761 = vpop.permute.xlu0 %760
      %v763 = vsub.f32 %v639, %v726
      %v764 = vsub.f32 %v641, %v731
      %v765 = vsub.f32 %v644, %v736
      %v766 = vsub.f32 %v646, %v741
      %v767 = vsub.f32 %v649, %v746
      %v768 = vsub.f32 %v651, %v751
      %v769 = vsub.f32 %v654, %v756
      %v770 = vsub.f32 %v656, %v761
      %v771 = vmul.f32 %v763, 1.442695
      %v772 = vpow.pop %v771
      %v773 = vmul.f32 %v764, 1.442695
      %v774 = vpow.pop %v773
      %v775 = vmul.f32 %v765, 1.442695
      %v776 = vpow.pop %v775
      %v777 = vmul.f32 %v766, 1.442695
      %v778 = vpow.pop %v777
      %v779 = vmul.f32 %v767, 1.442695
      %v780 = vpow.pop %v779
      %v781 = vmul.f32 %v768, 1.442695
      %v782 = vpow.pop %v781
      %v783 = vmul.f32 %v769, 1.442695
      %v784 = vpow.pop %v783
      %v785 = vmul.f32 %v770, 1.442695
      %v786 = vpow.pop %v785
      %v787 = vld [vmem:[#allocation3] sm:$0xff]
      %v788 = vld [vmem:[#allocation3 + $0x8] sm:$0xff]
      %v789 = vld [vmem:[#allocation3 + $0x10] sm:$0xff]
      %v790 = vld [vmem:[#allocation3 + $0x18] sm:$0xff]
      %v791 = vld [vmem:[#allocation3 + $0x20] sm:$0xff]
      %v792 = vld [vmem:[#allocation3 + $0x28] sm:$0xff]
      %v793 = vld [vmem:[#allocation3 + $0x30] sm:$0xff]
      %v794 = vld [vmem:[#allocation3 + $0x38] sm:$0xff]
      %v795 = vmul.f32 %v708, %v787
      %v796 = vmul.f32 %v710, %v788
      %v797 = vmul.f32 %v712, %v789
      %v798 = vmul.f32 %v714, %v790
      %v799 = vmul.f32 %v716, %v791
      %v800 = vmul.f32 %v718, %v792
      %v801 = vmul.f32 %v720, %v793
      %v802 = vmul.f32 %v722, %v794
      %v803 = vsel %vm666, %v772, 0.0
      %804 = vadd.xlane.f32.xlu0 %v803
      %v805 = vpop.xlane.xlu0 %804
      %v806 = vsel %vm666, %v774, 0.0
      %807 = vadd.xlane.f32.xlu0 %v806
      %v808 = vpop.xlane.xlu0 %807
      %v809 = vsel %vm666, %v776, 0.0
      %810 = vadd.xlane.f32.xlu0 %v809
      %v811 = vpop.xlane.xlu0 %810
      %v812 = vsel %vm666, %v778, 0.0
      %813 = vadd.xlane.f32.xlu0 %v812
      %v814 = vpop.xlane.xlu0 %813
      %v815 = vsel %vm666, %v780, 0.0
      %816 = vadd.xlane.f32.xlu0 %v815
      %v817 = vpop.xlane.xlu0 %816
      %v818 = vsel %vm666, %v782, 0.0
      %819 = vadd.xlane.f32.xlu0 %v818
      %v820 = vpop.xlane.xlu0 %819
      %v821 = vsel %vm666, %v784, 0.0
      %822 = vadd.xlane.f32.xlu0 %v821
      %v823 = vpop.xlane.xlu0 %822
      %v824 = vsel %vm666, %v786, 0.0
      %825 = vadd.xlane.f32.xlu0 %v824
      %v826 = vpop.xlane.xlu0 %825
      %v827 = vadd.f32 %v795, %v805
      %v828 = vadd.f32 %v796, %v808
      %v829 = vadd.f32 %v797, %v811
      %v830 = vadd.f32 %v798, %v814
      %v831 = vadd.f32 %v799, %v817
      %v832 = vadd.f32 %v800, %v820
      %v833 = vadd.f32 %v801, %v823
      %v834 = vadd.f32 %v802, %v826
      %vm835 = vcmask 7168
      %836 = vst.msk [vmem:[#allocation3] sm:$0xff] %vm835, %v827
      %837 = vst.msk [vmem:[#allocation3 + $0x8] sm:$0xff] %vm835, %v828
      %838 = vst.msk [vmem:[#allocation3 + $0x10] sm:$0xff] %vm835, %v829
      %839 = vst.msk [vmem:[#allocation3 + $0x18] sm:$0xff] %vm835, %v830
      %840 = vst.msk [vmem:[#allocation3 + $0x20] sm:$0xff] %vm835, %v831
      %841 = vst.msk [vmem:[#allocation3 + $0x28] sm:$0xff] %vm835, %v832
      %842 = vst.msk [vmem:[#allocation3 + $0x30] sm:$0xff] %vm835, %v833
      %843 = vst.msk [vmem:[#allocation3 + $0x38] sm:$0xff] %vm835, %v834
      %v844 = vld [vmem:[#allocation4] sm:$0xff]
      %v845 = vld [vmem:[#allocation4 + $0x8] sm:$0xff]
      %v846 = vld [vmem:[#allocation4 + $0x10] sm:$0xff]
      %v847 = vld [vmem:[#allocation4 + $0x18] sm:$0xff]
      %v848 = vld [vmem:[#allocation4 + $0x20] sm:$0xff]
      %v849 = vld [vmem:[#allocation4 + $0x28] sm:$0xff]
      %v850 = vld [vmem:[#allocation4 + $0x30] sm:$0xff]
      %v851 = vld [vmem:[#allocation4 + $0x38] sm:$0xff]
      %853 = vset.pattern.permute.xlu0 0
      %854 = vperm.xlu0 %853, %v708
      %v855 = vpop.permute.xlu0 %854
      %858 = vset.pattern.permute.xlu0 0
      %859 = vperm.xlu0 %858, %v710
      %v860 = vpop.permute.xlu0 %859
      %863 = vset.pattern.permute.xlu0 0
      %864 = vperm.xlu0 %863, %v712
      %v865 = vpop.permute.xlu0 %864
      %868 = vset.pattern.permute.xlu0 0
      %869 = vperm.xlu0 %868, %v714
      %v870 = vpop.permute.xlu0 %869
      %873 = vset.pattern.permute.xlu0 0
      %874 = vperm.xlu0 %873, %v716
      %v875 = vpop.permute.xlu0 %874
      %878 = vset.pattern.permute.xlu0 0
      %879 = vperm.xlu0 %878, %v718
      %v880 = vpop.permute.xlu0 %879
      %883 = vset.pattern.permute.xlu0 0
      %884 = vperm.xlu0 %883, %v720
      %v885 = vpop.permute.xlu0 %884
      %888 = vset.pattern.permute.xlu0 0
      %889 = vperm.xlu0 %888, %v722
      %v890 = vpop.permute.xlu0 %889
      %v892 = vmul.f32 %v855, %v844
      %v893 = vmul.f32 %v860, %v845
      %v894 = vmul.f32 %v865, %v846
      %v895 = vmul.f32 %v870, %v847
      %v896 = vmul.f32 %v875, %v848
      %v897 = vmul.f32 %v880, %v849
      %v898 = vmul.f32 %v885, %v850
      %v899 = vmul.f32 %v890, %v851
      %v900 = vpack.c.bf16 %v774, %v772
      %v901 = vpack.c.bf16 %v778, %v776
      %v902 = vpack.c.bf16 %v782, %v780
      %v903 = vpack.c.bf16 %v786, %v784
      %v912 = vunpack.c.l.b16 %v556
      %v913 = vunpack.c.l.b16 %v557
      %v914 = vunpack.c.l.b16 %v558
      %v915 = vunpack.c.l.b16 %v559
      %v916 = vunpack.c.l.b16 %v560
      %v917 = vunpack.c.l.b16 %v561
      %v918 = vunpack.c.l.b16 %v562
      %v919 = vunpack.c.l.b16 %v563
      %v920 = vpack.c.b16 %v913, %v912
      %v921 = vpack.c.b16 %v915, %v914
      %v922 = vpack.c.b16 %v917, %v916
      %v923 = vpack.c.b16 %v919, %v918
      %v929 = vsel %vm666, %v900, 0
      %v932 = vsel %vm666, %v901, 0
      %v935 = vsel %vm666, %v902, 0
      %v938 = vsel %vm666, %v903, 0
      %940 = vmatpush.bf16.msra.mxu0 0
      %941 = vmatpush.bf16.msra.mxu0 0
      %942 = vmatpush.bf16.msra.mxu0 0
      %943 = vmatpush.bf16.msra.mxu0 0
      %944 = vmatpush.bf16.msra.mxu0 %v923
      %945 = vmatpush.bf16.msra.mxu0 %v922
      %946 = vmatpush.bf16.msra.mxu0 %v921
      %947 = vmatpush.bf16.msra.mxu0 %v920
      %948 = vmatmul.bf16.gmra.mxu0 %v929
      %v949 = vpop.f32.mrf.mxu0
      %v950 = vadd.f32 0.0, %v949
      %v951 = vpop.f32.mrf.mxu0
      %v952 = vadd.f32 0.0, %v951
      %953 = vmatmul.bf16.gmra.mxu0 %v932
      %v954 = vpop.f32.mrf.mxu0
      %v955 = vadd.f32 0.0, %v954
      %v956 = vpop.f32.mrf.mxu0
      %v957 = vadd.f32 0.0, %v956
      %958 = vmatmul.bf16.gmra.mxu0 %v935
      %v959 = vpop.f32.mrf.mxu0
      %v960 = vadd.f32 0.0, %v959
      %v961 = vpop.f32.mrf.mxu0
      %v962 = vadd.f32 0.0, %v961
      %963 = vmatmul.bf16.gmra.mxu0 %v938
      %v964 = vpop.f32.mrf.mxu0
      %v965 = vadd.f32 0.0, %v964
      %v966 = vpop.f32.mrf.mxu0
      %v967 = vadd.f32 0.0, %v966
      %968 = vdwg.mxu0
      %v969 = vadd.f32 %v892, %v950
      %v970 = vadd.f32 %v893, %v952
      %v971 = vadd.f32 %v894, %v955
      %v972 = vadd.f32 %v895, %v957
      %v973 = vadd.f32 %v896, %v960
      %v974 = vadd.f32 %v897, %v962
      %v975 = vadd.f32 %v898, %v965
      %v976 = vadd.f32 %v899, %v967
      %977 = vst.msk [vmem:[#allocation4] sm:$0xff] %vm604, %v969
      %978 = vst.msk [vmem:[#allocation4 + $0x8] sm:$0xff] %vm604, %v970
      %979 = vst.msk [vmem:[#allocation4 + $0x10] sm:$0xff] %vm604, %v971
      %980 = vst.msk [vmem:[#allocation4 + $0x18] sm:$0xff] %vm604, %v972
      %981 = vst.msk [vmem:[#allocation4 + $0x20] sm:$0xff] %vm604, %v973
      %982 = vst.msk [vmem:[#allocation4 + $0x28] sm:$0xff] %vm604, %v974
      %983 = vst.msk [vmem:[#allocation4 + $0x30] sm:$0xff] %vm604, %v975
      %984 = vst.msk [vmem:[#allocation4 + $0x38] sm:$0xff] %vm604, %v976
      %985 = vst.msk [vmem:[#allocation2] sm:$0xff] %vm835, %v691
      %986 = vst.msk [vmem:[#allocation2 + $0x8] sm:$0xff] %vm835, %v692
      %987 = vst.msk [vmem:[#allocation2 + $0x10] sm:$0xff] %vm835, %v693
      %988 = vst.msk [vmem:[#allocation2 + $0x18] sm:$0xff] %vm835, %v694
      %989 = vst.msk [vmem:[#allocation2 + $0x20] sm:$0xff] %vm835, %v695
      %990 = vst.msk [vmem:[#allocation2 + $0x28] sm:$0xff] %vm835, %v696
      %991 = vst.msk [vmem:[#allocation2 + $0x30] sm:$0xff] %vm835, %v697
      %992 = vst.msk [vmem:[#allocation2 + $0x38] sm:$0xff] %vm835, %v698
      // Predicated region
      $region53: #{self_attention.3} parent=43 // pred_check
        %p993 = pneg %p477
      $region54: #{self_attention.3} parent=43 // pred_check_branch
        %995 = sbr.rel (%p993) target = $region56
      $region55: #{self_attention.3} parent=43 // pred_region
        %v996 = vld [vmem:[#allocation4] sm:$0xff]
        %v997 = vld [vmem:[#allocation4 + $0x8] sm:$0xff]
        %v998 = vld [vmem:[#allocation4 + $0x10] sm:$0xff]
        %v999 = vld [vmem:[#allocation4 + $0x18] sm:$0xff]
        %v1000 = vld [vmem:[#allocation4 + $0x20] sm:$0xff]
        %v1001 = vld [vmem:[#allocation4 + $0x28] sm:$0xff]
        %v1002 = vld [vmem:[#allocation4 + $0x30] sm:$0xff]
        %v1003 = vld [vmem:[#allocation4 + $0x38] sm:$0xff]
        %v1004 = vld [vmem:[#allocation3] sm:$0xff]
        %v1005 = vld [vmem:[#allocation3 + $0x8] sm:$0xff]
        %v1006 = vld [vmem:[#allocation3 + $0x10] sm:$0xff]
        %v1007 = vld [vmem:[#allocation3 + $0x18] sm:$0xff]
        %v1008 = vld [vmem:[#allocation3 + $0x20] sm:$0xff]
        %v1009 = vld [vmem:[#allocation3 + $0x28] sm:$0xff]
        %v1010 = vld [vmem:[#allocation3 + $0x30] sm:$0xff]
        %v1011 = vld [vmem:[#allocation3 + $0x38] sm:$0xff]
        %v1012 = vrcp.pop %v1004
        %v1013 = vrcp.pop %v1005
        %v1014 = vrcp.pop %v1006
        %v1015 = vrcp.pop %v1007
        %v1016 = vrcp.pop %v1008
        %v1017 = vrcp.pop %v1009
        %v1018 = vrcp.pop %v1010
        %v1019 = vrcp.pop %v1011
        %1021 = vset.pattern.permute.xlu0 0
        %1022 = vperm.xlu0 %1021, %v1012
        %v1023 = vpop.permute.xlu0 %1022
        %1026 = vset.pattern.permute.xlu0 0
        %1027 = vperm.xlu0 %1026, %v1013
        %v1028 = vpop.permute.xlu0 %1027
        %1031 = vset.pattern.permute.xlu0 0
        %1032 = vperm.xlu0 %1031, %v1014
        %v1033 = vpop.permute.xlu0 %1032
        %1036 = vset.pattern.permute.xlu0 0
        %1037 = vperm.xlu0 %1036, %v1015
        %v1038 = vpop.permute.xlu0 %1037
        %1041 = vset.pattern.permute.xlu0 0
        %1042 = vperm.xlu0 %1041, %v1016
        %v1043 = vpop.permute.xlu0 %1042
        %1046 = vset.pattern.permute.xlu0 0
        %1047 = vperm.xlu0 %1046, %v1017
        %v1048 = vpop.permute.xlu0 %1047
        %1051 = vset.pattern.permute.xlu0 0
        %1052 = vperm.xlu0 %1051, %v1018
        %v1053 = vpop.permute.xlu0 %1052
        %1056 = vset.pattern.permute.xlu0 0
        %1057 = vperm.xlu0 %1056, %v1019
        %v1058 = vpop.permute.xlu0 %1057
        %v1060 = vmul.f32 %v996, %v1023
        %v1061 = vmul.f32 %v997, %v1028
        %v1062 = vmul.f32 %v998, %v1033
        %v1063 = vmul.f32 %v999, %v1038
        %v1064 = vmul.f32 %v1000, %v1043
        %v1065 = vmul.f32 %v1001, %v1048
        %v1066 = vmul.f32 %v1002, %v1053
        %v1067 = vmul.f32 %v1003, %v1058
        %v1068 = vld [vmem:[#allocation5] sm:$0xff]
        %v1069 = vld [vmem:[#allocation5 + $0x8] sm:$0xff]
        %v1070 = vld [vmem:[#allocation5 + $0x10] sm:$0xff]
        %v1071 = vld [vmem:[#allocation5 + $0x18] sm:$0xff]
        %v1072 = vld [vmem:[#allocation5 + $0x20] sm:$0xff]
        %v1073 = vld [vmem:[#allocation5 + $0x28] sm:$0xff]
        %v1074 = vld [vmem:[#allocation5 + $0x30] sm:$0xff]
        %v1075 = vld [vmem:[#allocation5 + $0x38] sm:$0xff]
        %v1076 = vpack.c.bf16 %v1061, %v1060
        %v1077 = vpack.c.bf16 %v1063, %v1062
        %v1078 = vpack.c.bf16 %v1065, %v1064
        %v1079 = vpack.c.bf16 %v1067, %v1066
        %v1080 = vld [vmem:[%s422] sm:$0xf]
        %v1081 = vld [vmem:[%s422 + $0x4] sm:$0xf]
        %v1082 = vld [vmem:[%s422 + $0x8] sm:$0xf]
        %v1083 = vld [vmem:[%s422 + $0xc] sm:$0xf]
        %v1088 = vunpack.c.l.b16 %v1080
        %v1089 = vunpack.c.l.b16 %v1081
        %v1090 = vunpack.c.l.b16 %v1082
        %v1091 = vunpack.c.l.b16 %v1083
        %v1092 = vpack.c.b16 %v1089, %v1088
        %v1093 = vpack.c.b16 %v1091, %v1090
        %v1097 = vsel %vm604, %v1076, 0
        %v1100 = vsel %vm604, %v1077, 0
        %v1103 = vsel %vm604, %v1078, 0
        %v1106 = vsel %vm604, %v1079, 0
        %1108 = vmatpush.bf16.msra.mxu0 0
        %1109 = vmatpush.bf16.msra.mxu0 0
        %1110 = vmatpush.bf16.msra.mxu0 0
        %1111 = vmatpush.bf16.msra.mxu0 0
        %1112 = vmatpush.bf16.msra.mxu0 0
        %1113 = vmatpush.bf16.msra.mxu0 0
        %1114 = vmatpush.bf16.msra.mxu0 %v1093
        %1115 = vmatpush.bf16.msra.mxu0 %v1092
        %1116 = vmatmul.bf16.gmra.mxu0 %v1097
        %v1117 = vpop.f32.mrf.mxu0
        %v1118 = vadd.f32 0.0, %v1117
        %v1119 = vpop.f32.mrf.mxu0
        %v1120 = vadd.f32 0.0, %v1119
        %1121 = vmatmul.bf16.gmra.mxu0 %v1100
        %v1122 = vpop.f32.mrf.mxu0
        %v1123 = vadd.f32 0.0, %v1122
        %v1124 = vpop.f32.mrf.mxu0
        %v1125 = vadd.f32 0.0, %v1124
        %1126 = vmatmul.bf16.gmra.mxu0 %v1103
        %v1127 = vpop.f32.mrf.mxu0
        %v1128 = vadd.f32 0.0, %v1127
        %v1129 = vpop.f32.mrf.mxu0
        %v1130 = vadd.f32 0.0, %v1129
        %1131 = vmatmul.bf16.gmra.mxu0 %v1106
        %v1132 = vpop.f32.mrf.mxu0
        %v1133 = vadd.f32 0.0, %v1132
        %v1134 = vpop.f32.mrf.mxu0
        %v1135 = vadd.f32 0.0, %v1134
        %1136 = vdwg.mxu0
        %v1137 = vadd.f32 %v1068, %v1118
        %v1138 = vadd.f32 %v1069, %v1120
        %v1139 = vadd.f32 %v1070, %v1123
        %v1140 = vadd.f32 %v1071, %v1125
        %v1141 = vadd.f32 %v1072, %v1128
        %v1142 = vadd.f32 %v1073, %v1130
        %v1143 = vadd.f32 %v1074, %v1133
        %v1144 = vadd.f32 %v1075, %v1135
        %1145 = vst.msk [vmem:[#allocation5] sm:$0xff] %vm604, %v1137
        %1146 = vst.msk [vmem:[#allocation5 + $0x8] sm:$0xff] %vm604, %v1138
        %1147 = vst.msk [vmem:[#allocation5 + $0x10] sm:$0xff] %vm604, %v1139
        %1148 = vst.msk [vmem:[#allocation5 + $0x18] sm:$0xff] %vm604, %v1140
        %1149 = vst.msk [vmem:[#allocation5 + $0x20] sm:$0xff] %vm604, %v1141
        %1150 = vst.msk [vmem:[#allocation5 + $0x28] sm:$0xff] %vm604, %v1142
        %1151 = vst.msk [vmem:[#allocation5 + $0x30] sm:$0xff] %vm604, %v1143
        %1152 = vst.msk [vmem:[#allocation5 + $0x38] sm:$0xff] %vm604, %v1144
      $region56: #{self_attention.3} parent=43 // pred_fallthru
        _
      // Predicated region
      $region57: #{self_attention.3} parent=43 // pred_check
        _
      $region58: #{self_attention.3} parent=43 // pred_check_branch
        %1154 = sbr.rel (%p478) target = $region60
      $region59: #{self_attention.3} parent=43 // pred_region
        %v1155 = vld [vmem:[#allocation5] sm:$0xff]
        %v1156 = vld [vmem:[#allocation5 + $0x8] sm:$0xff]
        %v1157 = vld [vmem:[#allocation5 + $0x10] sm:$0xff]
        %v1158 = vld [vmem:[#allocation5 + $0x18] sm:$0xff]
        %v1159 = vld [vmem:[#allocation5 + $0x20] sm:$0xff]
        %v1160 = vld [vmem:[#allocation5 + $0x28] sm:$0xff]
        %v1161 = vld [vmem:[#allocation5 + $0x30] sm:$0xff]
        %v1162 = vld [vmem:[#allocation5 + $0x38] sm:$0xff]
        %1163 = vst.msk [vmem:[%s473] sm:$0xff] %vm604, %v1155
        %1164 = vst.msk [vmem:[%s473 + $0x8] sm:$0xff] %vm604, %v1156
        %1165 = vst.msk [vmem:[%s473 + $0x10] sm:$0xff] %vm604, %v1157
        %1166 = vst.msk [vmem:[%s473 + $0x18] sm:$0xff] %vm604, %v1158
        %1167 = vst.msk [vmem:[%s473 + $0x20] sm:$0xff] %vm604, %v1159
        %1168 = vst.msk [vmem:[%s473 + $0x28] sm:$0xff] %vm604, %v1160
        %1169 = vst.msk [vmem:[%s473 + $0x30] sm:$0xff] %vm604, %v1161
        %1170 = vst.msk [vmem:[%s473 + $0x38] sm:$0xff] %vm604, %v1162
      $region60: #{self_attention.3} parent=43 // pred_fallthru
        _
      %s1171 = smul.u32 8, %s24
      %p1172 = scmp.lt.s32.totalorder %s23, 1
      %s1173 = scalar_select %p1172, %s23, 1
      %p1174 = scmp.lt.s32.totalorder %s1171, 7
      %s1175 = scalar_select %p1174, %s1171, 7
      %s1176 = smul.addr %s1173, 8
      %s1177 = sadd.s32 %s1175, %s1176
      %s1178 = smul.addr %s1177, 8
      %s1179 = scalar_lea.vmem %s6, %s1178
      // Predicated region
      $region61: #{self_attention.3} parent=43 // pred_check
        %p1180 = pneg %p228
      $region62: #{self_attention.3} parent=43 // pred_check_branch
        %1182 = sbr.rel (%p1180) target = $region64
      $region63: #{self_attention.3} parent=43 // pred_region
        %s1183 = smul.u32 8, %s24
      $region64: #{self_attention.3} parent=43 // pred_fallthru
        _
    $region44: #{self_attention.3} parent=5 // pred_fallthru
      _
    %p1184 = scmp.le.s32.totalorder 2, %s12
    // Predicated region
    $region65: #{self_attention.3} parent=5 // pred_check
      %p1185 = pneg %p1184
    $region66: #{self_attention.3} parent=5 // pred_check_branch
      %1187 = sbr.rel (%p1185) target = $region68
    $region67: #{self_attention.3} parent=5 // pred_region
      %s1188 = ssub.s32 %s12, 2
      // Predicated region
      $region69: #{self_attention.3} parent=67 // pred_check
        %p1189 = pneg %p234
      $region70: #{self_attention.3} parent=67 // pred_check_branch
        %1191 = sbr.rel (%p1189) target = $region72
      $region71: #{self_attention.3} parent=67 // pred_region
        %s1192 = smul.u32 8, %s28
        %p1193 = scmp.lt.s32.totalorder %s27, 1
        %s1194 = scalar_select %p1193, %s27, 1
        %p1195 = scmp.lt.s32.totalorder %s1192, 7
        %s1196 = scalar_select %p1195, %s1192, 7
        %s1197 = smul.addr %s1194, 8
        %s1198 = sadd.s32 %s1196, %s1197
        %s1199 = smul.addr %s1198, 8
        %s1200 = scalar_lea.vmem %s6, %s1199
      $region72: #{self_attention.3} parent=67 // pred_fallthru
        _
    $region68: #{self_attention.3} parent=5 // pred_fallthru
      _
  $region6: #{self_attention.3} parent=0 // loop_footer
    %s16 = sadd.s32 1, %s12
  $region7: #{self_attention.3} parent=0 // loop_footer_branch
    %11 = sbr.rel target = $region3
  $region8: #{self_attention.3} parent=0 // loop_exit
    _

</llo_original>
